<compile_context>
chip_gen: v7x
topology: tpu7x:2x2x1
jax: 0.10.0
libtpu: 0.0.40
codegen_flags: <defaults>
</compile_context>

<pallas_src>
import jax
import jax.numpy as jnp
from jax import lax
from jax.experimental import pallas as pl
from jax.experimental.pallas import tpu as pltpu

# hiddenDimension is an undefined global in the reference module; pick 32.
HIDDEN_DIMENSION = 32

_NEG_SLOPE = 0.1
_K1, _S1, _P1 = 11, 2, 5          # conv1: kernel 11, stride 2, padding 5
_K2, _P2 = 7, 3                   # conv2: kernel 7, stride 1, padding 3
_K3, _P3 = 7, 3                   # conv3: kernel 7, stride 1, padding 3
_C1, _C2, _C3 = 4, 8, HIDDEN_DIMENSION


def _leaky(v, slope=_NEG_SLOPE):
    return jnp.where(v >= 0, v, v * slope)


def _replicate_pad_rows(a, pad):
    """Replicate ('edge') padding along the leading (length) axis of (L, C)."""
    top = jnp.broadcast_to(a[:1, :], (pad, a.shape[1]))
    bot = jnp.broadcast_to(a[-1:, :], (pad, a.shape[1]))
    return jnp.concatenate([top, a, bot], axis=0)


# ----------------------------------------------------------------------------
# Fused Pallas kernel: conv1 (im2col matmul) -> conv2 -> conv3, all in VMEM
# ----------------------------------------------------------------------------
def _encoder_kernel(x1_ref, w1_ref, b1_ref, w2_ref, b2_ref, w3_ref, b3_ref,
                    o_ref):
    # x1_ref : (1, L_out, K1)  pre-gathered conv1 patches for this batch elem
    # w1_ref : (K1, C1)   b1_ref : (1, C1)
    # w2_ref : (K2, C1, C2)   b2_ref : (1, C2)
    # w3_ref : (K3, C2, C3)   b3_ref : (1, C3)
    # o_ref  : (1, L_out, C3)
    l_out = x1_ref.shape[1]

    # ---- layer 1: one (L_out, K1) @ (K1, C1) matmul + bias + LeakyReLU ----
    a = jnp.dot(x1_ref[0], w1_ref[...], preferred_element_type=jnp.float32)
    a = _leaky(a + b1_ref[...])                               # (L_out, C1)

    # ---- layer 2: replicate-pad along length, accumulate K tap matmuls ----
    ap = _replicate_pad_rows(a, _P2)                          # (L_out+6, C1)
    acc = jnp.zeros((l_out, w2_ref.shape[2]), jnp.float32)
    for k in range(_K2):
        acc = acc + jnp.dot(ap[k:k + l_out, :], w2_ref[k],
                            preferred_element_type=jnp.float32)
    a = _leaky(acc + b2_ref[...])                             # (L_out, C2)

    # ---- layer 3: same scheme, no activation ----
    ap = _replicate_pad_rows(a, _P3)                          # (L_out+6, C2)
    acc = jnp.zeros((l_out, w3_ref.shape[2]), jnp.float32)
    for k in range(_K3):
        acc = acc + jnp.dot(ap[k:k + l_out, :], w3_ref[k],
                            preferred_element_type=jnp.float32)
    out = acc + b3_ref[...]                                   # (L_out, C3)

    # Channels-last already == PyTorch `out.permute(0, 2, 1)`.
    o_ref[0] = out.astype(o_ref.dtype)


# ----------------------------------------------------------------------------
# Forward wrapper
# ----------------------------------------------------------------------------
def encoder_forward(kparams, curvatures):
    """curvatures: (B, 1, L) float32 -> (B, numSubCurvatures, hiddenDimension)."""
    w1m, b1m = kparams["w1"], kparams["b1"]
    w2k, b2m = kparams["w2"], kparams["b2"]
    w3k, b3m = kparams["w3"], kparams["b3"]

    B, _, L = curvatures.shape
    l_out = (L + 2 * _P1 - _K1) // _S1 + 1     # = numSubCurvatures

    # Tiny layer-1 im2col (C_in == 1, B*L floats) kept in the wrapper; built
    # from strided slices (no XLA gather).  Layers 2/3 expand in-kernel.
    xp = jnp.pad(curvatures[:, 0, :], ((0, 0), (_P1, _P1)), mode="edge")
    cols = [xp[:, k:k + _S1 * l_out:_S1] for k in range(_K1)]
    x1col = jnp.stack(cols, axis=-1)                         # (B, L_out, K1)

    return pl.pallas_call(
        _encoder_kernel,
        out_shape=jax.ShapeDtypeStruct((B, l_out, _C3), jnp.float32),
        grid=(B,),
        in_specs=[
            pl.BlockSpec((1, l_out, _K1), lambda b: (b, 0, 0)),
            pl.BlockSpec((_K1, _C1), lambda b: (0, 0)),
            pl.BlockSpec((1, _C1), lambda b: (0, 0)),
            pl.BlockSpec((_K2, _C1, _C2), lambda b: (0, 0, 0)),
            pl.BlockSpec((1, _C2), lambda b: (0, 0)),
            pl.BlockSpec((_K3, _C2, _C3), lambda b: (0, 0, 0)),
            pl.BlockSpec((1, _C3), lambda b: (0, 0)),
        ],
        out_specs=pl.BlockSpec((1, l_out, _C3), lambda b: (b, 0, 0)),
        compiler_params=pltpu.CompilerParams(
            dimension_semantics=("parallel",)),   # shard batch across TCs (v7x)
    )(x1col, w1m, b1m, w2k, b2m, w3k, b3m)


# ----------------------------------------------------------------------------
# Parameter init (deterministic, mimics PyTorch default Conv1d init)
# ----------------------------------------------------------------------------
def _init_conv_params(key, c_out, c_in, k):
    fan_in = c_in * k
    bound = 1.0 / jnp.sqrt(fan_in)
    kw, kb = jax.random.split(key)
    w = jax.random.uniform(kw, (c_out, c_in, k), jnp.float32, -bound, bound)
    b = jax.random.uniform(kb, (c_out,), jnp.float32, -bound, bound)
    return w, b


def init_encoder_params(key):
    k1, k2, k3 = jax.random.split(key, 3)
    return {
        "conv1": _init_conv_params(k1, _C1, 1, _K1),
        "conv2": _init_conv_params(k2, _C2, _C1, _K2),
        "conv3": _init_conv_params(k3, _C3, _C2, _K3),
    }


def prepare_kernel_params(params):
    """One-time conversion from PyTorch Conv1d layout (C_out, C_in, K) to
    matmul-ready layouts; hoisted out of the per-call forward path."""
    w1, b1 = params["conv1"]
    w2, b2 = params["conv2"]
    w3, b3 = params["conv3"]
    return {
        "w1": jnp.transpose(w1[:, 0, :]).astype(jnp.float32),     # (K1, C1)
        "b1": b1.reshape(1, -1).astype(jnp.float32),              # (1, C1)
        "w2": jnp.transpose(w2, (2, 1, 0)).astype(jnp.float32),   # (K2, C1, C2)
        "b2": b2.reshape(1, -1).astype(jnp.float32),              # (1, C2)
        "w3": jnp.transpose(w3, (2, 1, 0)).astype(jnp.float32),   # (K3, C2, C3)
        "b3": b3.reshape(1, -1).astype(jnp.float32),              # (1, C3)
    }


# ----------------------------------------------------------------------------
# Pure-JAX reference (lax.conv) for the correctness check
# ----------------------------------------------------------------------------
def _ref_conv1d_replicate(x, w, b, *, stride, padding):
    xp = jnp.pad(x, ((0, 0), (0, 0), (padding, padding)), mode="edge")
    out = lax.conv_general_dilated(
        xp, w, window_strides=(stride,), padding="VALID",
        dimension_numbers=("NCH", "OIH", "NCH"))
    return out + b[None, :, None]


def encoder_reference(params, curvatures):
    w1, b1 = params["conv1"]
    w2, b2 = params["conv2"]
    w3, b3 = params["conv3"]
    out = _leaky(_ref_conv1d_replicate(curvatures, w1, b1, stride=_S1,
                                       padding=_P1))
    out = _leaky(_ref_conv1d_replicate(out, w2, b2, stride=1, padding=_P2))
    out = _ref_conv1d_replicate(out, w3, b3, stride=1, padding=_P3)
    return jnp.transpose(out, (0, 2, 1))


if __name__ == "__main__":
    key = jax.random.PRNGKey(0)
    kp, kx = jax.random.split(key)

    params = init_encoder_params(kp)
    kparams = prepare_kernel_params(params)

    # small deterministic input: (batch=2, channels=1, curvatureLength=16)
    curvatures = jax.random.normal(kx, (2, 1, 16), jnp.float32)

    out = jax.jit(encoder_forward)(kparams, curvatures)
    out = jax.block_until_ready(out)

    ref = encoder_reference(params, curvatures)
    assert out.shape == (2, 8, HIDDEN_DIMENSION), out.shape
    assert jnp.allclose(out, ref, atol=1e-4, rtol=1e-4), (
        float(jnp.max(jnp.abs(out - ref))))

    print("KERNEL_OK")
</pallas_src>

<mosaic_0001>
module attributes {stable_mosaic.version = 11 : i64} {
  func.func @_encoder_kernel(%arg0: i32, %arg1: memref<1x8x11xf32, #tpu.memory_space<vmem>>, %arg2: memref<11x4xf32, #tpu.memory_space<vmem>>, %arg3: memref<1x4xf32, #tpu.memory_space<vmem>>, %arg4: memref<7x4x8xf32, #tpu.memory_space<vmem>>, %arg5: memref<1x8xf32, #tpu.memory_space<vmem>>, %arg6: memref<7x8x32xf32, #tpu.memory_space<vmem>>, %arg7: memref<1x32xf32, #tpu.memory_space<vmem>>, %arg8: memref<1x8x32xf32, #tpu.memory_space<vmem>>) attributes {dimension_semantics = [#tpu.dimension_semantics<parallel>], iteration_bounds = array<i64: 2>, scalar_prefetch = 0 : i64, scratch_operands = 0 : i64, tpu.core_type = #tpu.core_type<tc>, window_params = [{transform_indices = @transform_0, window_bounds = array<i64: 1, 8, 11>}, {pipeline_mode = #tpu.pipeline_mode<synchronous>, transform_indices = @transform_1, window_bounds = array<i64: 11, 4>}, {pipeline_mode = #tpu.pipeline_mode<synchronous>, transform_indices = @transform_2, window_bounds = array<i64: 1, 4>}, {pipeline_mode = #tpu.pipeline_mode<synchronous>, transform_indices = @transform_3, window_bounds = array<i64: 7, 4, 8>}, {pipeline_mode = #tpu.pipeline_mode<synchronous>, transform_indices = @transform_4, window_bounds = array<i64: 1, 8>}, {pipeline_mode = #tpu.pipeline_mode<synchronous>, transform_indices = @transform_5, window_bounds = array<i64: 7, 8, 32>}, {pipeline_mode = #tpu.pipeline_mode<synchronous>, transform_indices = @transform_6, window_bounds = array<i64: 1, 32>}, {transform_indices = @transform_7, window_bounds = array<i64: 1, 8, 32>}]} {
    %c0 = arith.constant 0 : index
    %c0_0 = arith.constant 0 : index
    %c0_1 = arith.constant 0 : index
    %0 = vector.load %arg1[%c0, %c0_0, %c0_1] : memref<1x8x11xf32, #tpu.memory_space<vmem>>, vector<1x8x11xf32>
    %1 = vector.shape_cast %0 : vector<1x8x11xf32> to vector<8x11xf32>
    %c0_2 = arith.constant 0 : index
    %c0_3 = arith.constant 0 : index
    %2 = vector.load %arg2[%c0_2, %c0_3] : memref<11x4xf32, #tpu.memory_space<vmem>>, vector<11x4xf32>
    %cst = arith.constant dense<0.000000e+00> : vector<8x4xf32>
    %3 = tpu.matmul %1, %2, %cst {dimension_numbers = #tpu.dot_dimension_numbers<[1], [0], [0], [1], [0, 0, 1, 1], [], []>} : vector<8x11xf32>, vector<11x4xf32>, vector<8x4xf32> -> vector<8x4xf32>
    %c0_4 = arith.constant 0 : index
    %c0_5 = arith.constant 0 : index
    %4 = vector.load %arg3[%c0_4, %c0_5] : memref<1x4xf32, #tpu.memory_space<vmem>>, vector<1x4xf32>
    %5 = vector.broadcast %4 : vector<1x4xf32> to vector<8x4xf32>
    %6 = arith.addf %3, %5 : vector<8x4xf32>
    %cst_6 = arith.constant 0.000000e+00 : f32
    %7 = vector.broadcast %cst_6 : f32 to vector<8x4xf32>
    %8 = arith.cmpf oge, %6, %7 : vector<8x4xf32>
    %cst_7 = arith.constant 1.000000e-01 : f32
    %9 = vector.broadcast %cst_7 : f32 to vector<8x4xf32>
    %10 = arith.mulf %6, %9 : vector<8x4xf32>
    %11 = arith.select %8, %6, %10 : vector<8x4xi1>, vector<8x4xf32>
    %12 = vector.extract_strided_slice %11 {offsets = [0, 0], sizes = [1, 4], strides = [1, 1]} : vector<8x4xf32> to vector<1x4xf32>
    %13 = vector.shape_cast %12 : vector<1x4xf32> to vector<1x4xf32>
    %14 = vector.broadcast %13 : vector<1x4xf32> to vector<3x4xf32>
    %15 = vector.extract_strided_slice %11 {offsets = [7, 0], sizes = [1, 4], strides = [1, 1]} : vector<8x4xf32> to vector<1x4xf32>
    %16 = vector.shape_cast %15 : vector<1x4xf32> to vector<1x4xf32>
    %17 = vector.broadcast %16 : vector<1x4xf32> to vector<3x4xf32>
    %18 = tpu.concatenate %14, %11, %17 in 0 : vector<3x4xf32>, vector<8x4xf32>, vector<3x4xf32> -> vector<14x4xf32>
    %cst_8 = arith.constant 0.000000e+00 : f32
    %19 = vector.broadcast %cst_8 : f32 to vector<8x8xf32>
    %20 = vector.extract_strided_slice %18 {offsets = [0, 0], sizes = [8, 4], strides = [1, 1]} : vector<14x4xf32> to vector<8x4xf32>
    %c0_9 = arith.constant 0 : index
    %c0_10 = arith.constant 0 : index
    %c0_11 = arith.constant 0 : index
    %21 = vector.load %arg4[%c0_9, %c0_10, %c0_11] : memref<7x4x8xf32, #tpu.memory_space<vmem>>, vector<1x4x8xf32>
    %22 = vector.shape_cast %21 : vector<1x4x8xf32> to vector<4x8xf32>
    %cst_12 = arith.constant dense<0.000000e+00> : vector<8x8xf32>
    %23 = tpu.matmul %20, %22, %cst_12 {dimension_numbers = #tpu.dot_dimension_numbers<[1], [0], [0], [1], [0, 0, 1, 1], [], []>} : vector<8x4xf32>, vector<4x8xf32>, vector<8x8xf32> -> vector<8x8xf32>
    %24 = arith.addf %19, %23 : vector<8x8xf32>
    %25 = vector.extract_strided_slice %18 {offsets = [1, 0], sizes = [8, 4], strides = [1, 1]} : vector<14x4xf32> to vector<8x4xf32>
    %c1 = arith.constant 1 : index
    %c0_13 = arith.constant 0 : index
    %c0_14 = arith.constant 0 : index
    %26 = vector.load %arg4[%c1, %c0_13, %c0_14] : memref<7x4x8xf32, #tpu.memory_space<vmem>>, vector<1x4x8xf32>
    %27 = vector.shape_cast %26 : vector<1x4x8xf32> to vector<4x8xf32>
    %cst_15 = arith.constant dense<0.000000e+00> : vector<8x8xf32>
    %28 = tpu.matmul %25, %27, %cst_15 {dimension_numbers = #tpu.dot_dimension_numbers<[1], [0], [0], [1], [0, 0, 1, 1], [], []>} : vector<8x4xf32>, vector<4x8xf32>, vector<8x8xf32> -> vector<8x8xf32>
    %29 = arith.addf %24, %28 : vector<8x8xf32>
    %30 = vector.extract_strided_slice %18 {offsets = [2, 0], sizes = [8, 4], strides = [1, 1]} : vector<14x4xf32> to vector<8x4xf32>
    %c2 = arith.constant 2 : index
    %c0_16 = arith.constant 0 : index
    %c0_17 = arith.constant 0 : index
    %31 = vector.load %arg4[%c2, %c0_16, %c0_17] : memref<7x4x8xf32, #tpu.memory_space<vmem>>, vector<1x4x8xf32>
    %32 = vector.shape_cast %31 : vector<1x4x8xf32> to vector<4x8xf32>
    %cst_18 = arith.constant dense<0.000000e+00> : vector<8x8xf32>
    %33 = tpu.matmul %30, %32, %cst_18 {dimension_numbers = #tpu.dot_dimension_numbers<[1], [0], [0], [1], [0, 0, 1, 1], [], []>} : vector<8x4xf32>, vector<4x8xf32>, vector<8x8xf32> -> vector<8x8xf32>
    %34 = arith.addf %29, %33 : vector<8x8xf32>
    %35 = vector.extract_strided_slice %18 {offsets = [3, 0], sizes = [8, 4], strides = [1, 1]} : vector<14x4xf32> to vector<8x4xf32>
    %c3 = arith.constant 3 : index
    %c0_19 = arith.constant 0 : index
    %c0_20 = arith.constant 0 : index
    %36 = vector.load %arg4[%c3, %c0_19, %c0_20] : memref<7x4x8xf32, #tpu.memory_space<vmem>>, vector<1x4x8xf32>
    %37 = vector.shape_cast %36 : vector<1x4x8xf32> to vector<4x8xf32>
    %cst_21 = arith.constant dense<0.000000e+00> : vector<8x8xf32>
    %38 = tpu.matmul %35, %37, %cst_21 {dimension_numbers = #tpu.dot_dimension_numbers<[1], [0], [0], [1], [0, 0, 1, 1], [], []>} : vector<8x4xf32>, vector<4x8xf32>, vector<8x8xf32> -> vector<8x8xf32>
    %39 = arith.addf %34, %38 : vector<8x8xf32>
    %40 = vector.extract_strided_slice %18 {offsets = [4, 0], sizes = [8, 4], strides = [1, 1]} : vector<14x4xf32> to vector<8x4xf32>
    %c4 = arith.constant 4 : index
    %c0_22 = arith.constant 0 : index
    %c0_23 = arith.constant 0 : index
    %41 = vector.load %arg4[%c4, %c0_22, %c0_23] : memref<7x4x8xf32, #tpu.memory_space<vmem>>, vector<1x4x8xf32>
    %42 = vector.shape_cast %41 : vector<1x4x8xf32> to vector<4x8xf32>
    %cst_24 = arith.constant dense<0.000000e+00> : vector<8x8xf32>
    %43 = tpu.matmul %40, %42, %cst_24 {dimension_numbers = #tpu.dot_dimension_numbers<[1], [0], [0], [1], [0, 0, 1, 1], [], []>} : vector<8x4xf32>, vector<4x8xf32>, vector<8x8xf32> -> vector<8x8xf32>
    %44 = arith.addf %39, %43 : vector<8x8xf32>
    %45 = vector.extract_strided_slice %18 {offsets = [5, 0], sizes = [8, 4], strides = [1, 1]} : vector<14x4xf32> to vector<8x4xf32>
    %c5 = arith.constant 5 : index
    %c0_25 = arith.constant 0 : index
    %c0_26 = arith.constant 0 : index
    %46 = vector.load %arg4[%c5, %c0_25, %c0_26] : memref<7x4x8xf32, #tpu.memory_space<vmem>>, vector<1x4x8xf32>
    %47 = vector.shape_cast %46 : vector<1x4x8xf32> to vector<4x8xf32>
    %cst_27 = arith.constant dense<0.000000e+00> : vector<8x8xf32>
    %48 = tpu.matmul %45, %47, %cst_27 {dimension_numbers = #tpu.dot_dimension_numbers<[1], [0], [0], [1], [0, 0, 1, 1], [], []>} : vector<8x4xf32>, vector<4x8xf32>, vector<8x8xf32> -> vector<8x8xf32>
    %49 = arith.addf %44, %48 : vector<8x8xf32>
    %50 = vector.extract_strided_slice %18 {offsets = [6, 0], sizes = [8, 4], strides = [1, 1]} : vector<14x4xf32> to vector<8x4xf32>
    %c6 = arith.constant 6 : index
    %c0_28 = arith.constant 0 : index
    %c0_29 = arith.constant 0 : index
    %51 = vector.load %arg4[%c6, %c0_28, %c0_29] : memref<7x4x8xf32, #tpu.memory_space<vmem>>, vector<1x4x8xf32>
    %52 = vector.shape_cast %51 : vector<1x4x8xf32> to vector<4x8xf32>
    %cst_30 = arith.constant dense<0.000000e+00> : vector<8x8xf32>
    %53 = tpu.matmul %50, %52, %cst_30 {dimension_numbers = #tpu.dot_dimension_numbers<[1], [0], [0], [1], [0, 0, 1, 1], [], []>} : vector<8x4xf32>, vector<4x8xf32>, vector<8x8xf32> -> vector<8x8xf32>
    %54 = arith.addf %49, %53 : vector<8x8xf32>
    %c0_31 = arith.constant 0 : index
    %c0_32 = arith.constant 0 : index
    %55 = vector.load %arg5[%c0_31, %c0_32] : memref<1x8xf32, #tpu.memory_space<vmem>>, vector<1x8xf32>
    %56 = vector.broadcast %55 : vector<1x8xf32> to vector<8x8xf32>
    %57 = arith.addf %54, %56 : vector<8x8xf32>
    %cst_33 = arith.constant 0.000000e+00 : f32
    %58 = vector.broadcast %cst_33 : f32 to vector<8x8xf32>
    %59 = arith.cmpf oge, %57, %58 : vector<8x8xf32>
    %cst_34 = arith.constant 1.000000e-01 : f32
    %60 = vector.broadcast %cst_34 : f32 to vector<8x8xf32>
    %61 = arith.mulf %57, %60 : vector<8x8xf32>
    %62 = arith.select %59, %57, %61 : vector<8x8xi1>, vector<8x8xf32>
    %63 = vector.extract_strided_slice %62 {offsets = [0, 0], sizes = [1, 8], strides = [1, 1]} : vector<8x8xf32> to vector<1x8xf32>
    %64 = vector.shape_cast %63 : vector<1x8xf32> to vector<1x8xf32>
    %65 = vector.broadcast %64 : vector<1x8xf32> to vector<3x8xf32>
    %66 = vector.extract_strided_slice %62 {offsets = [7, 0], sizes = [1, 8], strides = [1, 1]} : vector<8x8xf32> to vector<1x8xf32>
    %67 = vector.shape_cast %66 : vector<1x8xf32> to vector<1x8xf32>
    %68 = vector.broadcast %67 : vector<1x8xf32> to vector<3x8xf32>
    %69 = tpu.concatenate %65, %62, %68 in 0 : vector<3x8xf32>, vector<8x8xf32>, vector<3x8xf32> -> vector<14x8xf32>
    %cst_35 = arith.constant 0.000000e+00 : f32
    %70 = vector.broadcast %cst_35 : f32 to vector<8x32xf32>
    %71 = vector.extract_strided_slice %69 {offsets = [0, 0], sizes = [8, 8], strides = [1, 1]} : vector<14x8xf32> to vector<8x8xf32>
    %c0_36 = arith.constant 0 : index
    %c0_37 = arith.constant 0 : index
    %c0_38 = arith.constant 0 : index
    %72 = vector.load %arg6[%c0_36, %c0_37, %c0_38] : memref<7x8x32xf32, #tpu.memory_space<vmem>>, vector<1x8x32xf32>
    %73 = vector.shape_cast %72 : vector<1x8x32xf32> to vector<8x32xf32>
    %cst_39 = arith.constant dense<0.000000e+00> : vector<8x32xf32>
    %74 = tpu.matmul %71, %73, %cst_39 {dimension_numbers = #tpu.dot_dimension_numbers<[1], [0], [0], [1], [0, 0, 1, 1], [], []>} : vector<8x8xf32>, vector<8x32xf32>, vector<8x32xf32> -> vector<8x32xf32>
    %75 = arith.addf %70, %74 : vector<8x32xf32>
    %76 = vector.extract_strided_slice %69 {offsets = [1, 0], sizes = [8, 8], strides = [1, 1]} : vector<14x8xf32> to vector<8x8xf32>
    %c1_40 = arith.constant 1 : index
    %c0_41 = arith.constant 0 : index
    %c0_42 = arith.constant 0 : index
    %77 = vector.load %arg6[%c1_40, %c0_41, %c0_42] : memref<7x8x32xf32, #tpu.memory_space<vmem>>, vector<1x8x32xf32>
    %78 = vector.shape_cast %77 : vector<1x8x32xf32> to vector<8x32xf32>
    %cst_43 = arith.constant dense<0.000000e+00> : vector<8x32xf32>
    %79 = tpu.matmul %76, %78, %cst_43 {dimension_numbers = #tpu.dot_dimension_numbers<[1], [0], [0], [1], [0, 0, 1, 1], [], []>} : vector<8x8xf32>, vector<8x32xf32>, vector<8x32xf32> -> vector<8x32xf32>
    %80 = arith.addf %75, %79 : vector<8x32xf32>
    %81 = vector.extract_strided_slice %69 {offsets = [2, 0], sizes = [8, 8], strides = [1, 1]} : vector<14x8xf32> to vector<8x8xf32>
    %c2_44 = arith.constant 2 : index
    %c0_45 = arith.constant 0 : index
    %c0_46 = arith.constant 0 : index
    %82 = vector.load %arg6[%c2_44, %c0_45, %c0_46] : memref<7x8x32xf32, #tpu.memory_space<vmem>>, vector<1x8x32xf32>
    %83 = vector.shape_cast %82 : vector<1x8x32xf32> to vector<8x32xf32>
    %cst_47 = arith.constant dense<0.000000e+00> : vector<8x32xf32>
    %84 = tpu.matmul %81, %83, %cst_47 {dimension_numbers = #tpu.dot_dimension_numbers<[1], [0], [0], [1], [0, 0, 1, 1], [], []>} : vector<8x8xf32>, vector<8x32xf32>, vector<8x32xf32> -> vector<8x32xf32>
    %85 = arith.addf %80, %84 : vector<8x32xf32>
    %86 = vector.extract_strided_slice %69 {offsets = [3, 0], sizes = [8, 8], strides = [1, 1]} : vector<14x8xf32> to vector<8x8xf32>
    %c3_48 = arith.constant 3 : index
    %c0_49 = arith.constant 0 : index
    %c0_50 = arith.constant 0 : index
    %87 = vector.load %arg6[%c3_48, %c0_49, %c0_50] : memref<7x8x32xf32, #tpu.memory_space<vmem>>, vector<1x8x32xf32>
    %88 = vector.shape_cast %87 : vector<1x8x32xf32> to vector<8x32xf32>
    %cst_51 = arith.constant dense<0.000000e+00> : vector<8x32xf32>
    %89 = tpu.matmul %86, %88, %cst_51 {dimension_numbers = #tpu.dot_dimension_numbers<[1], [0], [0], [1], [0, 0, 1, 1], [], []>} : vector<8x8xf32>, vector<8x32xf32>, vector<8x32xf32> -> vector<8x32xf32>
    %90 = arith.addf %85, %89 : vector<8x32xf32>
    %91 = vector.extract_strided_slice %69 {offsets = [4, 0], sizes = [8, 8], strides = [1, 1]} : vector<14x8xf32> to vector<8x8xf32>
    %c4_52 = arith.constant 4 : index
    %c0_53 = arith.constant 0 : index
    %c0_54 = arith.constant 0 : index
    %92 = vector.load %arg6[%c4_52, %c0_53, %c0_54] : memref<7x8x32xf32, #tpu.memory_space<vmem>>, vector<1x8x32xf32>
    %93 = vector.shape_cast %92 : vector<1x8x32xf32> to vector<8x32xf32>
    %cst_55 = arith.constant dense<0.000000e+00> : vector<8x32xf32>
    %94 = tpu.matmul %91, %93, %cst_55 {dimension_numbers = #tpu.dot_dimension_numbers<[1], [0], [0], [1], [0, 0, 1, 1], [], []>} : vector<8x8xf32>, vector<8x32xf32>, vector<8x32xf32> -> vector<8x32xf32>
    %95 = arith.addf %90, %94 : vector<8x32xf32>
    %96 = vector.extract_strided_slice %69 {offsets = [5, 0], sizes = [8, 8], strides = [1, 1]} : vector<14x8xf32> to vector<8x8xf32>
    %c5_56 = arith.constant 5 : index
    %c0_57 = arith.constant 0 : index
    %c0_58 = arith.constant 0 : index
    %97 = vector.load %arg6[%c5_56, %c0_57, %c0_58] : memref<7x8x32xf32, #tpu.memory_space<vmem>>, vector<1x8x32xf32>
    %98 = vector.shape_cast %97 : vector<1x8x32xf32> to vector<8x32xf32>
    %cst_59 = arith.constant dense<0.000000e+00> : vector<8x32xf32>
    %99 = tpu.matmul %96, %98, %cst_59 {dimension_numbers = #tpu.dot_dimension_numbers<[1], [0], [0], [1], [0, 0, 1, 1], [], []>} : vector<8x8xf32>, vector<8x32xf32>, vector<8x32xf32> -> vector<8x32xf32>
    %100 = arith.addf %95, %99 : vector<8x32xf32>
    %101 = vector.extract_strided_slice %69 {offsets = [6, 0], sizes = [8, 8], strides = [1, 1]} : vector<14x8xf32> to vector<8x8xf32>
    %c6_60 = arith.constant 6 : index
    %c0_61 = arith.constant 0 : index
    %c0_62 = arith.constant 0 : index
    %102 = vector.load %arg6[%c6_60, %c0_61, %c0_62] : memref<7x8x32xf32, #tpu.memory_space<vmem>>, vector<1x8x32xf32>
    %103 = vector.shape_cast %102 : vector<1x8x32xf32> to vector<8x32xf32>
    %cst_63 = arith.constant dense<0.000000e+00> : vector<8x32xf32>
    %104 = tpu.matmul %101, %103, %cst_63 {dimension_numbers = #tpu.dot_dimension_numbers<[1], [0], [0], [1], [0, 0, 1, 1], [], []>} : vector<8x8xf32>, vector<8x32xf32>, vector<8x32xf32> -> vector<8x32xf32>
    %105 = arith.addf %100, %104 : vector<8x32xf32>
    %c0_64 = arith.constant 0 : index
    %c0_65 = arith.constant 0 : index
    %106 = vector.load %arg7[%c0_64, %c0_65] : memref<1x32xf32, #tpu.memory_space<vmem>>, vector<1x32xf32>
    %107 = vector.broadcast %106 : vector<1x32xf32> to vector<8x32xf32>
    %108 = arith.addf %105, %107 : vector<8x32xf32>
    %c0_66 = arith.constant 0 : index
    %c0_67 = arith.constant 0 : index
    %c0_68 = arith.constant 0 : index
    %109 = vector.load %arg8[%c0_66, %c0_67, %c0_68] : memref<1x8x32xf32, #tpu.memory_space<vmem>>, vector<1x8x32xf32>
    %110 = vector.shape_cast %109 : vector<1x8x32xf32> to vector<8x32xf32>
    %111 = vector.shape_cast %108 : vector<8x32xf32> to vector<1x8x32xf32>
    tpu.vector_store %arg8[%c0_66, %c0_67, %c0_68], %111 {strides = array<i32>} : memref<1x8x32xf32, #tpu.memory_space<vmem>>, vector<1x8x32xf32>,
    return
  }
  func.func @transform_0(%arg0: i32) -> (i32, i32, i32) {
    %c0_i32 = arith.constant 0 : i32
    %c0_i32_0 = arith.constant 0 : i32
    %c0_i32_1 = arith.constant 0 : i32
    return %arg0, %c0_i32, %c0_i32_0 : i32, i32, i32
  }
  func.func @transform_1(%arg0: i32) -> (i32, i32) {
    %c0_i32 = arith.constant 0 : i32
    %c0_i32_0 = arith.constant 0 : i32
    %c0_i32_1 = arith.constant 0 : i32
    return %c0_i32, %c0_i32_0 : i32, i32
  }
  func.func @transform_2(%arg0: i32) -> (i32, i32) {
    %c0_i32 = arith.constant 0 : i32
    %c0_i32_0 = arith.constant 0 : i32
    %c0_i32_1 = arith.constant 0 : i32
    return %c0_i32, %c0_i32_0 : i32, i32
  }
  func.func @transform_3(%arg0: i32) -> (i32, i32, i32) {
    %c0_i32 = arith.constant 0 : i32
    %c0_i32_0 = arith.constant 0 : i32
    %c0_i32_1 = arith.constant 0 : i32
    %c0_i32_2 = arith.constant 0 : i32
    return %c0_i32, %c0_i32_0, %c0_i32_1 : i32, i32, i32
  }
  func.func @transform_4(%arg0: i32) -> (i32, i32) {
    %c0_i32 = arith.constant 0 : i32
    %c0_i32_0 = arith.constant 0 : i32
    %c0_i32_1 = arith.constant 0 : i32
    return %c0_i32, %c0_i32_0 : i32, i32
  }
  func.func @transform_5(%arg0: i32) -> (i32, i32, i32) {
    %c0_i32 = arith.constant 0 : i32
    %c0_i32_0 = arith.constant 0 : i32
    %c0_i32_1 = arith.constant 0 : i32
    %c0_i32_2 = arith.constant 0 : i32
    return %c0_i32, %c0_i32_0, %c0_i32_1 : i32, i32, i32
  }
  func.func @transform_6(%arg0: i32) -> (i32, i32) {
    %c0_i32 = arith.constant 0 : i32
    %c0_i32_0 = arith.constant 0 : i32
    %c0_i32_1 = arith.constant 0 : i32
    return %c0_i32, %c0_i32_0 : i32, i32
  }
  func.func @transform_7(%arg0: i32) -> (i32, i32, i32) {
    %c0_i32 = arith.constant 0 : i32
    %c0_i32_0 = arith.constant 0 : i32
    %c0_i32_1 = arith.constant 0 : i32
    return %arg0, %c0_i32, %c0_i32_0 : i32, i32, i32
  }
}

</mosaic_0001>

<llo_original>
// kernel: encoder_forward.1
$region0: #{encoder_forward.1}
  #allocation0 [shape = 'u32[]', space=smem, size = 0x4, offset = 0x4, fixed_abs, tag = 'smem constant byte address 0x4 - core index']
  #allocation1 [shape = 'u32[144,128]{1,0:T(1,128)}', space=vmem, size = 0x12000, scoped, tag = 'internal scratch']
  %s0 = inlined_call_operand.vmem [shape: f32[2,8,11], index: 0, kind: input, shape index: {}]
  %s1 = inlined_call_operand.vmem [shape: f32[11,4], index: 1, kind: input, shape index: {}]
  %s2 = inlined_call_operand.vmem [shape: f32[1,4], index: 2, kind: input, shape index: {}]
  %s3 = inlined_call_operand.vmem [shape: f32[7,4,8], index: 3, kind: input, shape index: {}]
  %s4 = inlined_call_operand.vmem [shape: f32[1,8], index: 4, kind: input, shape index: {}]
  %s5 = inlined_call_operand.vmem [shape: f32[7,8,32], index: 5, kind: input, shape index: {}]
  %s6 = inlined_call_operand.vmem [shape: f32[1,32], index: 6, kind: input, shape index: {}]
  %s7 = inlined_call_operand.hbm [shape: f32[2,8,32], index: 7, kind: output, shape index: {}]
  %s8 = sld [smem:[#allocation0]]
  $region61: #{encoder_forward.1} parent=0
    _
  %s10 = ssub.s32 1, %s8
  %s11 = scalar_select 0, %s10, %s8
  $region1: #{encoder_forward.1} parent=0
    #allocation2 [shape = 'u8[8192]{0}', space=vmem, size = 0x2000, scoped, tag = 'output window, operand 0']
    #allocation3 [shape = 's32[2]{0}', space=sflag, size = 0x8, scoped, tag = 'scoped memory for encoder_forward.1']
    %12 = vsyncpa [#allocation3], 0
    %s13 = scalar_lea.sflag [#allocation3], 1
    %14 = vsyncpa %s13, 0
    loop: start=0, step=1, limit=4
    $region2: #{encoder_forward.1} parent=1 // loop_pre_header
      _
    $region3: #{encoder_forward.1} parent=1 // loop_header
      %s16 = sphi 0, %s20
      %p17 = scmp.ge.s32.totalorder %s16, 4
      %s26 = sphi 0, %s28
      %s29 = sphi 0, %s26
      %s30 = sphi 0, %s29
      %s46 = sphi 0, %s30
      %s50 = sphi 0, %s50
      %s52 = sphi 0, %s50
      %s53 = sphi 0, %s52
      %s67 = sphi 0, %s53
      %s71 = sphi 0, %s71
      %s73 = sphi 0, %s71
      %s74 = sphi 0, %s73
      %s88 = sphi 0, %s74
      %s92 = sphi 0, %s92
      %s94 = sphi 0, %s92
      %s95 = sphi 0, %s94
      %s109 = sphi 0, %s95
      %s113 = sphi 0, %s113
      %s115 = sphi 0, %s113
      %s116 = sphi 0, %s115
      %s130 = sphi 0, %s116
      %s134 = sphi 0, %s134
      %s136 = sphi 0, %s134
      %s137 = sphi 0, %s136
      %s151 = sphi 0, %s137
      %s155 = sphi 0, %s155
      %s157 = sphi 0, %s155
      %s158 = sphi 0, %s157
      %s172 = sphi 0, %s158
      %s178 = sphi 0, %s180
      %s181 = sphi 0, %s178
      %s182 = sphi 0, %s181
      %s198 = sphi 0, %s182
    $region4: #{encoder_forward.1} parent=1 // loop_header_branch
      %19 = sbr.rel (%p17) target = $region8
    $region5: #{encoder_forward.1} parent=1 // loop_body
      %s21 = ssub.s32 %s16, 1
      %s22 = ssub.s32 %s16, 2
      %s23 = sadd.s32 %s16, 1
      %s24 = ssub.s32 %s16, %s23
      %p25 = scmp.eq.s32.totalorder %s24, 0
      %s27 = sadd.s32 %s26, 1
      %s28 = scalar_select %p25, %s26, %s27
      %p31 = pneg %p25
      %p32 = scmp.eq.s32.totalorder %s16, 1
      %p33 = por %p31, %p32
      %p34 = scmp.ne.s32.totalorder %s26, %s29
      %p35 = scmp.eq.s32.totalorder %s16, 0
      %p36 = por %p34, %p35
      %p37 = scmp.ne.s32.totalorder %s26, %s29
      %p38 = scmp.eq.s32.totalorder %s21, 1
      %p39 = por %p37, %p38
      %p40 = scmp.ne.s32.totalorder %s29, %s30
      %p41 = scmp.eq.s32.totalorder %s21, 0
      %p42 = por %p40, %p41
      %p43 = scmp.ne.s32.totalorder %s29, %s30
      %p44 = scmp.eq.s32.totalorder %s22, 1
      %p45 = por %p43, %p44
      %p47 = scmp.ne.s32.totalorder %s30, %s46
      %p48 = scmp.eq.s32.totalorder %s22, 0
      %p49 = por %p47, %p48
      %s51 = sadd.s32 %s50, 1
      %p54 = scmp.eq.s32.totalorder %s16, 1
      %p55 = scmp.ne.s32.totalorder %s50, %s52
      %p56 = scmp.eq.s32.totalorder %s16, 0
      %p57 = por %p55, %p56
      %p58 = scmp.ne.s32.totalorder %s50, %s52
      %p59 = scmp.eq.s32.totalorder %s21, 1
      %p60 = por %p58, %p59
      %p61 = scmp.ne.s32.totalorder %s52, %s53
      %p62 = scmp.eq.s32.totalorder %s21, 0
      %p63 = por %p61, %p62
      %p64 = scmp.ne.s32.totalorder %s52, %s53
      %p65 = scmp.eq.s32.totalorder %s22, 1
      %p66 = por %p64, %p65
      %p68 = scmp.ne.s32.totalorder %s53, %s67
      %p69 = scmp.eq.s32.totalorder %s22, 0
      %p70 = por %p68, %p69
      %s72 = sadd.s32 %s71, 1
      %p75 = scmp.eq.s32.totalorder %s16, 1
      %p76 = scmp.ne.s32.totalorder %s71, %s73
      %p77 = scmp.eq.s32.totalorder %s16, 0
      %p78 = por %p76, %p77
      %p79 = scmp.ne.s32.totalorder %s71, %s73
      %p80 = scmp.eq.s32.totalorder %s21, 1
      %p81 = por %p79, %p80
      %p82 = scmp.ne.s32.totalorder %s73, %s74
      %p83 = scmp.eq.s32.totalorder %s21, 0
      %p84 = por %p82, %p83
      %p85 = scmp.ne.s32.totalorder %s73, %s74
      %p86 = scmp.eq.s32.totalorder %s22, 1
      %p87 = por %p85, %p86
      %p89 = scmp.ne.s32.totalorder %s74, %s88
      %p90 = scmp.eq.s32.totalorder %s22, 0
      %p91 = por %p89, %p90
      %s93 = sadd.s32 %s92, 1
      %p96 = scmp.eq.s32.totalorder %s16, 1
      %p97 = scmp.ne.s32.totalorder %s92, %s94
      %p98 = scmp.eq.s32.totalorder %s16, 0
      %p99 = por %p97, %p98
      %p100 = scmp.ne.s32.totalorder %s92, %s94
      %p101 = scmp.eq.s32.totalorder %s21, 1
      %p102 = por %p100, %p101
      %p103 = scmp.ne.s32.totalorder %s94, %s95
      %p104 = scmp.eq.s32.totalorder %s21, 0
      %p105 = por %p103, %p104
      %p106 = scmp.ne.s32.totalorder %s94, %s95
      %p107 = scmp.eq.s32.totalorder %s22, 1
      %p108 = por %p106, %p107
      %p110 = scmp.ne.s32.totalorder %s95, %s109
      %p111 = scmp.eq.s32.totalorder %s22, 0
      %p112 = por %p110, %p111
      %s114 = sadd.s32 %s113, 1
      %p117 = scmp.eq.s32.totalorder %s16, 1
      %p118 = scmp.ne.s32.totalorder %s113, %s115
      %p119 = scmp.eq.s32.totalorder %s16, 0
      %p120 = por %p118, %p119
      %p121 = scmp.ne.s32.totalorder %s113, %s115
      %p122 = scmp.eq.s32.totalorder %s21, 1
      %p123 = por %p121, %p122
      %p124 = scmp.ne.s32.totalorder %s115, %s116
      %p125 = scmp.eq.s32.totalorder %s21, 0
      %p126 = por %p124, %p125
      %p127 = scmp.ne.s32.totalorder %s115, %s116
      %p128 = scmp.eq.s32.totalorder %s22, 1
      %p129 = por %p127, %p128
      %p131 = scmp.ne.s32.totalorder %s116, %s130
      %p132 = scmp.eq.s32.totalorder %s22, 0
      %p133 = por %p131, %p132
      %s135 = sadd.s32 %s134, 1
      %p138 = scmp.eq.s32.totalorder %s16, 1
      %p139 = scmp.ne.s32.totalorder %s134, %s136
      %p140 = scmp.eq.s32.totalorder %s16, 0
      %p141 = por %p139, %p140
      %p142 = scmp.ne.s32.totalorder %s134, %s136
      %p143 = scmp.eq.s32.totalorder %s21, 1
      %p144 = por %p142, %p143
      %p145 = scmp.ne.s32.totalorder %s136, %s137
      %p146 = scmp.eq.s32.totalorder %s21, 0
      %p147 = por %p145, %p146
      %p148 = scmp.ne.s32.totalorder %s136, %s137
      %p149 = scmp.eq.s32.totalorder %s22, 1
      %p150 = por %p148, %p149
      %p152 = scmp.ne.s32.totalorder %s137, %s151
      %p153 = scmp.eq.s32.totalorder %s22, 0
      %p154 = por %p152, %p153
      %s156 = sadd.s32 %s155, 1
      %p159 = scmp.eq.s32.totalorder %s16, 1
      %p160 = scmp.ne.s32.totalorder %s155, %s157
      %p161 = scmp.eq.s32.totalorder %s16, 0
      %p162 = por %p160, %p161
      %p163 = scmp.ne.s32.totalorder %s155, %s157
      %p164 = scmp.eq.s32.totalorder %s21, 1
      %p165 = por %p163, %p164
      %p166 = scmp.ne.s32.totalorder %s157, %s158
      %p167 = scmp.eq.s32.totalorder %s21, 0
      %p168 = por %p166, %p167
      %p169 = scmp.ne.s32.totalorder %s157, %s158
      %p170 = scmp.eq.s32.totalorder %s22, 1
      %p171 = por %p169, %p170
      %p173 = scmp.ne.s32.totalorder %s158, %s172
      %p174 = scmp.eq.s32.totalorder %s22, 0
      %p175 = por %p173, %p174
      %s176 = ssub.s32 %s16, %s23
      %p177 = scmp.eq.s32.totalorder %s176, 0
      %s179 = sadd.s32 %s178, 1
      %s180 = scalar_select %p177, %s178, %s179
      %p183 = pneg %p177
      %p184 = scmp.eq.s32.totalorder %s16, 1
      %p185 = por %p183, %p184
      %p186 = scmp.ne.s32.totalorder %s178, %s181
      %p187 = scmp.eq.s32.totalorder %s16, 0
      %p188 = por %p186, %p187
      %p189 = scmp.ne.s32.totalorder %s178, %s181
      %p190 = scmp.eq.s32.totalorder %s21, 1
      %p191 = por %p189, %p190
      %p192 = scmp.ne.s32.totalorder %s181, %s182
      %p193 = scmp.eq.s32.totalorder %s21, 0
      %p194 = por %p192, %p193
      %p195 = scmp.ne.s32.totalorder %s181, %s182
      %p196 = scmp.eq.s32.totalorder %s22, 1
      %p197 = por %p195, %p196
      %p199 = scmp.ne.s32.totalorder %s182, %s198
      %p200 = scmp.eq.s32.totalorder %s22, 0
      %p201 = por %p199, %p200
      %p202 = scmp.le.s32.totalorder 1, %s16
      %p203 = scmp.lt.s32.totalorder %s16, 3
      %p204 = pnand %p202, %p203
      %p205 = pneg %p204
      // Predicated region
      $region9: #{encoder_forward.1} parent=5 // pred_check
        _
      $region10: #{encoder_forward.1} parent=5 // pred_check_branch
        %207 = sbr.rel (%p204) target = $region12
      $region11: #{encoder_forward.1} parent=5 // pred_region
        %s208 = ssub.s32 %s16, 1
        // Predicated region
        $region13: #{encoder_forward.1} parent=11 // pred_check
          %p209 = pneg %p63
        $region14: #{encoder_forward.1} parent=11 // pred_check_branch
          %211 = sbr.rel (%p209) target = $region16
        $region15: #{encoder_forward.1} parent=11 // pred_region
          _
        $region16: #{encoder_forward.1} parent=11 // pred_fallthru
          _
        // Predicated region
        $region17: #{encoder_forward.1} parent=11 // pred_check
          %p212 = pneg %p84
        $region18: #{encoder_forward.1} parent=11 // pred_check_branch
          %214 = sbr.rel (%p212) target = $region20
        $region19: #{encoder_forward.1} parent=11 // pred_region
          _
        $region20: #{encoder_forward.1} parent=11 // pred_fallthru
          _
        // Predicated region
        $region21: #{encoder_forward.1} parent=11 // pred_check
          %p215 = pneg %p105
        $region22: #{encoder_forward.1} parent=11 // pred_check_branch
          %217 = sbr.rel (%p215) target = $region24
        $region23: #{encoder_forward.1} parent=11 // pred_region
          _
        $region24: #{encoder_forward.1} parent=11 // pred_fallthru
          _
        // Predicated region
        $region25: #{encoder_forward.1} parent=11 // pred_check
          %p218 = pneg %p126
        $region26: #{encoder_forward.1} parent=11 // pred_check_branch
          %220 = sbr.rel (%p218) target = $region28
        $region27: #{encoder_forward.1} parent=11 // pred_region
          _
        $region28: #{encoder_forward.1} parent=11 // pred_fallthru
          _
        // Predicated region
        $region29: #{encoder_forward.1} parent=11 // pred_check
          %p221 = pneg %p147
        $region30: #{encoder_forward.1} parent=11 // pred_check_branch
          %223 = sbr.rel (%p221) target = $region32
        $region31: #{encoder_forward.1} parent=11 // pred_region
          _
        $region32: #{encoder_forward.1} parent=11 // pred_fallthru
          _
        // Predicated region
        $region33: #{encoder_forward.1} parent=11 // pred_check
          %p224 = pneg %p168
        $region34: #{encoder_forward.1} parent=11 // pred_check_branch
          %226 = sbr.rel (%p224) target = $region36
        $region35: #{encoder_forward.1} parent=11 // pred_region
          _
        $region36: #{encoder_forward.1} parent=11 // pred_fallthru
          _
      $region12: #{encoder_forward.1} parent=5 // pred_fallthru
        _
      %p227 = scmp.lt.s32.totalorder %s16, 2
      // Predicated region
      $region37: #{encoder_forward.1} parent=5 // pred_check
        %p228 = pneg %p227
      $region38: #{encoder_forward.1} parent=5 // pred_check_branch
        %230 = sbr.rel (%p228) target = $region40
      $region39: #{encoder_forward.1} parent=5 // pred_region
        // Predicated region
        $region41: #{encoder_forward.1} parent=39 // pred_check
          %p231 = pneg %p36
        $region42: #{encoder_forward.1} parent=39 // pred_check_branch
          %233 = sbr.rel (%p231) target = $region44
        $region43: #{encoder_forward.1} parent=39 // pred_region
          %p234 = scmp.lt.s32.totalorder %s16, 1
          %s235 = scalar_select %p234, %s16, 1
          %s236 = smul.addr %s235, 8
          %s237 = scalar_lea.vmem %s0, %s236
        $region44: #{encoder_forward.1} parent=39 // pred_fallthru
          _
      $region40: #{encoder_forward.1} parent=5 // pred_fallthru
        _
      %p238 = scmp.le.s32.totalorder 1, %s16
      %p239 = scmp.lt.s32.totalorder %s16, 3
      %p240 = pnand %p238, %p239
      %p241 = pneg %p240
      // Predicated region
      $region45: #{encoder_forward.1} parent=5 // pred_check
        _
      $region46: #{encoder_forward.1} parent=5 // pred_check_branch
        %243 = sbr.rel (%p240) target = $region48
      $region47: #{encoder_forward.1} parent=5 // pred_region
        %s244 = ssub.s32 %s16, 1
        %p245 = scmp.lt.s32.totalorder %s21, 1
        %s246 = scalar_select %p245, %s21, 1
        %s247 = smul.addr %s246, 8
        %s248 = scalar_lea.vmem %s0, %s247
        %p249 = pneg %p42
        %p250 = pneg %p39
        %p251 = pneg %p63
        %p252 = pneg %p60
        %p253 = pneg %p84
        %p254 = pneg %p81
        %p255 = pneg %p105
        %p256 = pneg %p102
        %p257 = pneg %p126
        %p258 = pneg %p123
        %p259 = pneg %p147
        %p260 = pneg %p144
        %p261 = pneg %p168
        %p262 = pneg %p165
        %p263 = pneg %p194
        %p264 = pneg %p191
        %s265 = sand.u32 %s181, 1
        %s266 = scalar_lea.sflag [#allocation3], %s265
        %s267 = sand.u32 %s181, 1
        %s268 = smul.addr %s267, 8
        %s269 = scalar_lea.vmem [#allocation2], %s268
        %p270 = scmp.lt.s32.totalorder %s21, 1
        %s271 = scalar_select %p270, %s21, 1
        %s272 = smul.addr %s271, 8
        %s273 = scalar_lea.vmem %s0, %s272
        %v274 = vld [vmem:[%s273] sm:$0xff]
        %v275 = vld [vmem:[%s1] sm:$0xff]
        %v276 = vld [vmem:[%s1 + $0x8] sm:$0x7]
        %v277 = vld [vmem:[%s2] sm:$0x1]
        %v279 = vlaneseq
        %v280 = vshrl.u32 %v279, 7
        %v281 = vsub.s32 0, %v280
        %v282 = vrot.slane %v277, %v281
        %vm284 = vcmask 89088
        %v286 = vsel %vm284, %v274, 0
        %vm288 = vcmask 1042432
        %v290 = vsel %vm288, %v276, 0
        %292 = vmatprep.subr.mxu0 0.0
        %293 = vmatpush1.msra.mxu0 %v275
        %294 = vmatprep.subr.mxu0 0.0
        %295 = vmatpush1.msra.mxu0 %v290
        %296 = vmatprep.subr.mxu0 0.0
        %297 = vmatpush1.msra.mxu0 0.0
        %298 = vmatprep.subr.mxu0 0.0
        %299 = vmatpush1.msra.mxu0 0.0
        %300 = vmatprep.subr.mxu0 0.0
        %301 = vmatpush1.msra.mxu0 0.0
        %302 = vmatprep.subr.mxu0 0.0
        %303 = vmatpush1.msra.mxu0 0.0
        %304 = vmatprep.subr.mxu0 0.0
        %305 = vmatpush1.msra.mxu0 0.0
        %306 = vmatprep.subr.mxu0 0.0
        %307 = vmatpush1.msra.mxu0 0.0
        %308 = vmatprep.subr.mxu0 0.0
        %309 = vmatpush1.msra.mxu0 0.0
        %310 = vmatprep.subr.mxu0 0.0
        %311 = vmatpush1.msra.mxu0 0.0
        %312 = vmatprep.subr.mxu0 0.0
        %313 = vmatpush1.msra.mxu0 0.0
        %314 = vmatprep.subr.mxu0 0.0
        %315 = vmatpush1.msra.mxu0 0.0
        %316 = vmatprep.subr.mxu0 0.0
        %317 = vmatpush1.msra.mxu0 0.0
        %318 = vmatprep.subr.mxu0 0.0
        %319 = vmatpush1.msra.mxu0 0.0
        %320 = vmatprep.subr.mxu0 0.0
        %321 = vmatpush1.msra.mxu0 0.0
        %322 = vmatprep.subr.mxu0 0.0
        %323 = vmatpush1.msra.mxu0 0.0
        %324 = vmatprep.subr.mxu0 0.0
        %325 = vmatpush1.msra.mxu0 0.0
        %326 = vmatprep.subr.mxu0 0.0
        %327 = vmatpush1.msra.mxu0 0.0
        %328 = vmatprep.subr.mxu0 0.0
        %329 = vmatpush1.msra.mxu0 0.0
        %330 = vmatprep.subr.mxu0 0.0
        %331 = vmatpush1.msra.mxu0 0.0
        %332 = vmatprep.subr.mxu0 0.0
        %333 = vmatpush1.msra.mxu0 0.0
        %334 = vmatprep.subr.mxu0 0.0
        %335 = vmatpush1.msra.mxu0 0.0
        %336 = vmatprep.subr.mxu0 0.0
        %337 = vmatpush1.msra.mxu0 0.0
        %338 = vmatprep.subr.mxu0 0.0
        %339 = vmatpush1.msra.mxu0 0.0
        %340 = vmatprep.subr.mxu0 0.0
        %341 = vmatpush1.msra.mxu0 0.0
        %342 = vmatprep.subr.mxu0 0.0
        %343 = vmatpush1.msra.mxu0 0.0
        %344 = vmatprep.subr.mxu0 0.0
        %345 = vmatpush1.msra.mxu0 0.0
        %346 = vmatprep.subr.mxu0 0.0
        %347 = vmatpush1.msra.mxu0 0.0
        %348 = vmatprep.subr.mxu0 0.0
        %349 = vmatpush1.msra.mxu0 0.0
        %350 = vmatprep.subr.mxu0 0.0
        %351 = vmatpush1.msra.mxu0 0.0
        %352 = vmatprep.subr.mxu0 0.0
        %353 = vmatpush1.msra.mxu0 0.0
        %354 = vmatprep.subr.mxu0 0.0
        %355 = vmatpush1.msra.mxu0 0.0
        %356 = vmatprep.mubr.f32.mxu0 0.0
        %357 = vmatmul.mubr.f32.gmra.mrb[0].mxu0 %v286
        %v358 = vpop.f32.mrb[0].mxu0
        %v359 = vadd.f32 %v282, %v358
        %v360 = vpop.f32.mrb[0].mxu0
        %361 = vdwg.mxu0
        %vm362 = vcmp.ge.f32.partialorder %v359, 0.0
        %v363 = vmul.f32 %v359, 0.1
        %v364 = vsel %vm362, %v359, %v363
        %v365 = vlaneseq
        %v366 = vshrl.u32 %v365, 7
        %v367 = vsub.s32 0, %v366
        %v368 = vrot.slane %v364, %v367
        %v369 = vlaneseq
        %v370 = vshrl.u32 %v369, 7
        %v371 = vsub.s32 7, %v370
        %v372 = vrot.slane %v364, %v371
        %v374 = vrot.slane %v364, 5
        %v376 = vsel %vm288, %v368, %v374
        %v377 = vsel %vm288, %v374, %v372
        %v378 = vld [vmem:[%s3] sm:$0xf]
        %s379 = scalar_lea.vmem %s3, 4
        %v380 = vld [vmem:[%s379] sm:$0xf]
        %vm383 = vcmask 1046528
        %v384 = vrot.slane %v376, 1
        %v385 = vrot.slane %v377, 1
        %v386 = vsel %vm383, %v384, %v385
        %vm387 = vcmask 31744
        %v388 = vsel %vm387, %v386, 0
        %vm390 = vcmask 1043456
        %v392 = vsel %vm390, %v380, 0
        %394 = vmatprep.subr.mxu0 0.0
        %395 = vmatpush1.msra.mxu0 %v392
        %396 = vmatprep.subr.mxu0 0.0
        %397 = vmatpush1.msra.mxu0 0.0
        %398 = vmatprep.subr.mxu0 0.0
        %399 = vmatpush1.msra.mxu0 0.0
        %400 = vmatprep.subr.mxu0 0.0
        %401 = vmatpush1.msra.mxu0 0.0
        %402 = vmatprep.subr.mxu0 0.0
        %403 = vmatpush1.msra.mxu0 0.0
        %404 = vmatprep.subr.mxu0 0.0
        %405 = vmatpush1.msra.mxu0 0.0
        %406 = vmatprep.subr.mxu0 0.0
        %407 = vmatpush1.msra.mxu0 0.0
        %408 = vmatprep.subr.mxu0 0.0
        %409 = vmatpush1.msra.mxu0 0.0
        %410 = vmatprep.subr.mxu0 0.0
        %411 = vmatpush1.msra.mxu0 0.0
        %412 = vmatprep.subr.mxu0 0.0
        %413 = vmatpush1.msra.mxu0 0.0
        %414 = vmatprep.subr.mxu0 0.0
        %415 = vmatpush1.msra.mxu0 0.0
        %416 = vmatprep.subr.mxu0 0.0
        %417 = vmatpush1.msra.mxu0 0.0
        %418 = vmatprep.subr.mxu0 0.0
        %419 = vmatpush1.msra.mxu0 0.0
        %420 = vmatprep.subr.mxu0 0.0
        %421 = vmatpush1.msra.mxu0 0.0
        %422 = vmatprep.subr.mxu0 0.0
        %423 = vmatpush1.msra.mxu0 0.0
        %424 = vmatprep.subr.mxu0 0.0
        %425 = vmatpush1.msra.mxu0 0.0
        %426 = vmatprep.subr.mxu0 0.0
        %427 = vmatpush1.msra.mxu0 0.0
        %428 = vmatprep.subr.mxu0 0.0
        %429 = vmatpush1.msra.mxu0 0.0
        %430 = vmatprep.subr.mxu0 0.0
        %431 = vmatpush1.msra.mxu0 0.0
        %432 = vmatprep.subr.mxu0 0.0
        %433 = vmatpush1.msra.mxu0 0.0
        %434 = vmatprep.subr.mxu0 0.0
        %435 = vmatpush1.msra.mxu0 0.0
        %436 = vmatprep.subr.mxu0 0.0
        %437 = vmatpush1.msra.mxu0 0.0
        %438 = vmatprep.subr.mxu0 0.0
        %439 = vmatpush1.msra.mxu0 0.0
        %440 = vmatprep.subr.mxu0 0.0
        %441 = vmatpush1.msra.mxu0 0.0
        %442 = vmatprep.subr.mxu0 0.0
        %443 = vmatpush1.msra.mxu0 0.0
        %444 = vmatprep.subr.mxu0 0.0
        %445 = vmatpush1.msra.mxu0 0.0
        %446 = vmatprep.subr.mxu0 0.0
        %447 = vmatpush1.msra.mxu0 0.0
        %448 = vmatprep.subr.mxu0 0.0
        %449 = vmatpush1.msra.mxu0 0.0
        %450 = vmatprep.subr.mxu0 0.0
        %451 = vmatpush1.msra.mxu0 0.0
        %452 = vmatprep.subr.mxu0 0.0
        %453 = vmatpush1.msra.mxu0 0.0
        %454 = vmatprep.subr.mxu0 0.0
        %455 = vmatpush1.msra.mxu0 0.0
        %456 = vmatprep.subr.mxu0 0.0
        %457 = vmatpush1.msra.mxu0 0.0
        %458 = vmatprep.mubr.f32.mxu0 0.0
        %459 = vmatmul.mubr.f32.gmra.mrb[0].mxu0 %v388
        %v460 = vpop.f32.mrb[0].mxu0
        %v461 = vadd.f32 0.0, %v460
        %v462 = vpop.f32.mrb[0].mxu0
        %463 = vdwg.mxu0
        %v464 = vsel %vm387, %v376, 0
        %v467 = vsel %vm390, %v378, 0
        %469 = vmatprep.subr.mxu0 0.0
        %470 = vmatpush1.msra.mxu0 %v467
        %471 = vmatprep.subr.mxu0 0.0
        %472 = vmatpush1.msra.mxu0 0.0
        %473 = vmatprep.subr.mxu0 0.0
        %474 = vmatpush1.msra.mxu0 0.0
        %475 = vmatprep.subr.mxu0 0.0
        %476 = vmatpush1.msra.mxu0 0.0
        %477 = vmatprep.subr.mxu0 0.0
        %478 = vmatpush1.msra.mxu0 0.0
        %479 = vmatprep.subr.mxu0 0.0
        %480 = vmatpush1.msra.mxu0 0.0
        %481 = vmatprep.subr.mxu0 0.0
        %482 = vmatpush1.msra.mxu0 0.0
        %483 = vmatprep.subr.mxu0 0.0
        %484 = vmatpush1.msra.mxu0 0.0
        %485 = vmatprep.subr.mxu0 0.0
        %486 = vmatpush1.msra.mxu0 0.0
        %487 = vmatprep.subr.mxu0 0.0
        %488 = vmatpush1.msra.mxu0 0.0
        %489 = vmatprep.subr.mxu0 0.0
        %490 = vmatpush1.msra.mxu0 0.0
        %491 = vmatprep.subr.mxu0 0.0
        %492 = vmatpush1.msra.mxu0 0.0
        %493 = vmatprep.subr.mxu0 0.0
        %494 = vmatpush1.msra.mxu0 0.0
        %495 = vmatprep.subr.mxu0 0.0
        %496 = vmatpush1.msra.mxu0 0.0
        %497 = vmatprep.subr.mxu0 0.0
        %498 = vmatpush1.msra.mxu0 0.0
        %499 = vmatprep.subr.mxu0 0.0
        %500 = vmatpush1.msra.mxu0 0.0
        %501 = vmatprep.subr.mxu0 0.0
        %502 = vmatpush1.msra.mxu0 0.0
        %503 = vmatprep.subr.mxu0 0.0
        %504 = vmatpush1.msra.mxu0 0.0
        %505 = vmatprep.subr.mxu0 0.0
        %506 = vmatpush1.msra.mxu0 0.0
        %507 = vmatprep.subr.mxu0 0.0
        %508 = vmatpush1.msra.mxu0 0.0
        %509 = vmatprep.subr.mxu0 0.0
        %510 = vmatpush1.msra.mxu0 0.0
        %511 = vmatprep.subr.mxu0 0.0
        %512 = vmatpush1.msra.mxu0 0.0
        %513 = vmatprep.subr.mxu0 0.0
        %514 = vmatpush1.msra.mxu0 0.0
        %515 = vmatprep.subr.mxu0 0.0
        %516 = vmatpush1.msra.mxu0 0.0
        %517 = vmatprep.subr.mxu0 0.0
        %518 = vmatpush1.msra.mxu0 0.0
        %519 = vmatprep.subr.mxu0 0.0
        %520 = vmatpush1.msra.mxu0 0.0
        %521 = vmatprep.subr.mxu0 0.0
        %522 = vmatpush1.msra.mxu0 0.0
        %523 = vmatprep.subr.mxu0 0.0
        %524 = vmatpush1.msra.mxu0 0.0
        %525 = vmatprep.subr.mxu0 0.0
        %526 = vmatpush1.msra.mxu0 0.0
        %527 = vmatprep.subr.mxu0 0.0
        %528 = vmatpush1.msra.mxu0 0.0
        %529 = vmatprep.subr.mxu0 0.0
        %530 = vmatpush1.msra.mxu0 0.0
        %531 = vmatprep.subr.mxu0 0.0
        %532 = vmatpush1.msra.mxu0 0.0
        %533 = vmatprep.mubr.f32.mxu0 0.0
        %534 = vmatmul.mubr.f32.gmra.mrb[0].mxu0 %v464
        %v535 = vpop.f32.mrb[0].mxu0
        %v536 = vadd.f32 %v461, %v535
        %v537 = vpop.f32.mrb[0].mxu0
        %538 = vdwg.mxu0
        %s539 = scalar_lea.vmem %s3, 8
        %v540 = vld [vmem:[%s539] sm:$0xf]
        %vm541 = vcmask 1045504
        %v542 = vrot.slane %v376, 2
        %v543 = vrot.slane %v377, 2
        %v544 = vsel %vm541, %v542, %v543
        %v545 = vsel %vm387, %v544, 0
        %v548 = vsel %vm390, %v540, 0
        %550 = vmatprep.subr.mxu0 0.0
        %551 = vmatpush1.msra.mxu0 %v548
        %552 = vmatprep.subr.mxu0 0.0
        %553 = vmatpush1.msra.mxu0 0.0
        %554 = vmatprep.subr.mxu0 0.0
        %555 = vmatpush1.msra.mxu0 0.0
        %556 = vmatprep.subr.mxu0 0.0
        %557 = vmatpush1.msra.mxu0 0.0
        %558 = vmatprep.subr.mxu0 0.0
        %559 = vmatpush1.msra.mxu0 0.0
        %560 = vmatprep.subr.mxu0 0.0
        %561 = vmatpush1.msra.mxu0 0.0
        %562 = vmatprep.subr.mxu0 0.0
        %563 = vmatpush1.msra.mxu0 0.0
        %564 = vmatprep.subr.mxu0 0.0
        %565 = vmatpush1.msra.mxu0 0.0
        %566 = vmatprep.subr.mxu0 0.0
        %567 = vmatpush1.msra.mxu0 0.0
        %568 = vmatprep.subr.mxu0 0.0
        %569 = vmatpush1.msra.mxu0 0.0
        %570 = vmatprep.subr.mxu0 0.0
        %571 = vmatpush1.msra.mxu0 0.0
        %572 = vmatprep.subr.mxu0 0.0
        %573 = vmatpush1.msra.mxu0 0.0
        %574 = vmatprep.subr.mxu0 0.0
        %575 = vmatpush1.msra.mxu0 0.0
        %576 = vmatprep.subr.mxu0 0.0
        %577 = vmatpush1.msra.mxu0 0.0
        %578 = vmatprep.subr.mxu0 0.0
        %579 = vmatpush1.msra.mxu0 0.0
        %580 = vmatprep.subr.mxu0 0.0
        %581 = vmatpush1.msra.mxu0 0.0
        %582 = vmatprep.subr.mxu0 0.0
        %583 = vmatpush1.msra.mxu0 0.0
        %584 = vmatprep.subr.mxu0 0.0
        %585 = vmatpush1.msra.mxu0 0.0
        %586 = vmatprep.subr.mxu0 0.0
        %587 = vmatpush1.msra.mxu0 0.0
        %588 = vmatprep.subr.mxu0 0.0
        %589 = vmatpush1.msra.mxu0 0.0
        %590 = vmatprep.subr.mxu0 0.0
        %591 = vmatpush1.msra.mxu0 0.0
        %592 = vmatprep.subr.mxu0 0.0
        %593 = vmatpush1.msra.mxu0 0.0
        %594 = vmatprep.subr.mxu0 0.0
        %595 = vmatpush1.msra.mxu0 0.0
        %596 = vmatprep.subr.mxu0 0.0
        %597 = vmatpush1.msra.mxu0 0.0
        %598 = vmatprep.subr.mxu0 0.0
        %599 = vmatpush1.msra.mxu0 0.0
        %600 = vmatprep.subr.mxu0 0.0
        %601 = vmatpush1.msra.mxu0 0.0
        %602 = vmatprep.subr.mxu0 0.0
        %603 = vmatpush1.msra.mxu0 0.0
        %604 = vmatprep.subr.mxu0 0.0
        %605 = vmatpush1.msra.mxu0 0.0
        %606 = vmatprep.subr.mxu0 0.0
        %607 = vmatpush1.msra.mxu0 0.0
        %608 = vmatprep.subr.mxu0 0.0
        %609 = vmatpush1.msra.mxu0 0.0
        %610 = vmatprep.subr.mxu0 0.0
        %611 = vmatpush1.msra.mxu0 0.0
        %612 = vmatprep.subr.mxu0 0.0
        %613 = vmatpush1.msra.mxu0 0.0
        %614 = vmatprep.mubr.f32.mxu0 0.0
        %615 = vmatmul.mubr.f32.gmra.mrb[0].mxu0 %v545
        %v616 = vpop.f32.mrb[0].mxu0
        %v617 = vadd.f32 0.0, %v616
        %v618 = vpop.f32.mrb[0].mxu0
        %619 = vdwg.mxu0
        %v620 = vadd.f32 %v536, %v617
        %s621 = scalar_lea.vmem %s3, 12
        %v622 = vld [vmem:[%s621] sm:$0xf]
        %vm623 = vcmask 1044480
        %v624 = vrot.slane %v376, 3
        %v625 = vrot.slane %v377, 3
        %v626 = vsel %vm623, %v624, %v625
        %v627 = vsel %vm387, %v626, 0
        %v630 = vsel %vm390, %v622, 0
        %632 = vmatprep.subr.mxu0 0.0
        %633 = vmatpush1.msra.mxu0 %v630
        %634 = vmatprep.subr.mxu0 0.0
        %635 = vmatpush1.msra.mxu0 0.0
        %636 = vmatprep.subr.mxu0 0.0
        %637 = vmatpush1.msra.mxu0 0.0
        %638 = vmatprep.subr.mxu0 0.0
        %639 = vmatpush1.msra.mxu0 0.0
        %640 = vmatprep.subr.mxu0 0.0
        %641 = vmatpush1.msra.mxu0 0.0
        %642 = vmatprep.subr.mxu0 0.0
        %643 = vmatpush1.msra.mxu0 0.0
        %644 = vmatprep.subr.mxu0 0.0
        %645 = vmatpush1.msra.mxu0 0.0
        %646 = vmatprep.subr.mxu0 0.0
        %647 = vmatpush1.msra.mxu0 0.0
        %648 = vmatprep.subr.mxu0 0.0
        %649 = vmatpush1.msra.mxu0 0.0
        %650 = vmatprep.subr.mxu0 0.0
        %651 = vmatpush1.msra.mxu0 0.0
        %652 = vmatprep.subr.mxu0 0.0
        %653 = vmatpush1.msra.mxu0 0.0
        %654 = vmatprep.subr.mxu0 0.0
        %655 = vmatpush1.msra.mxu0 0.0
        %656 = vmatprep.subr.mxu0 0.0
        %657 = vmatpush1.msra.mxu0 0.0
        %658 = vmatprep.subr.mxu0 0.0
        %659 = vmatpush1.msra.mxu0 0.0
        %660 = vmatprep.subr.mxu0 0.0
        %661 = vmatpush1.msra.mxu0 0.0
        %662 = vmatprep.subr.mxu0 0.0
        %663 = vmatpush1.msra.mxu0 0.0
        %664 = vmatprep.subr.mxu0 0.0
        %665 = vmatpush1.msra.mxu0 0.0
        %666 = vmatprep.subr.mxu0 0.0
        %667 = vmatpush1.msra.mxu0 0.0
        %668 = vmatprep.subr.mxu0 0.0
        %669 = vmatpush1.msra.mxu0 0.0
        %670 = vmatprep.subr.mxu0 0.0
        %671 = vmatpush1.msra.mxu0 0.0
        %672 = vmatprep.subr.mxu0 0.0
        %673 = vmatpush1.msra.mxu0 0.0
        %674 = vmatprep.subr.mxu0 0.0
        %675 = vmatpush1.msra.mxu0 0.0
        %676 = vmatprep.subr.mxu0 0.0
        %677 = vmatpush1.msra.mxu0 0.0
        %678 = vmatprep.subr.mxu0 0.0
        %679 = vmatpush1.msra.mxu0 0.0
        %680 = vmatprep.subr.mxu0 0.0
        %681 = vmatpush1.msra.mxu0 0.0
        %682 = vmatprep.subr.mxu0 0.0
        %683 = vmatpush1.msra.mxu0 0.0
        %684 = vmatprep.subr.mxu0 0.0
        %685 = vmatpush1.msra.mxu0 0.0
        %686 = vmatprep.subr.mxu0 0.0
        %687 = vmatpush1.msra.mxu0 0.0
        %688 = vmatprep.subr.mxu0 0.0
        %689 = vmatpush1.msra.mxu0 0.0
        %690 = vmatprep.subr.mxu0 0.0
        %691 = vmatpush1.msra.mxu0 0.0
        %692 = vmatprep.subr.mxu0 0.0
        %693 = vmatpush1.msra.mxu0 0.0
        %694 = vmatprep.subr.mxu0 0.0
        %695 = vmatpush1.msra.mxu0 0.0
        %696 = vmatprep.mubr.f32.mxu0 0.0
        %697 = vmatmul.mubr.f32.gmra.mrb[0].mxu0 %v627
        %v698 = vpop.f32.mrb[0].mxu0
        %v699 = vadd.f32 0.0, %v698
        %v700 = vpop.f32.mrb[0].mxu0
        %701 = vdwg.mxu0
        %v702 = vadd.f32 %v620, %v699
        %s703 = scalar_lea.vmem %s3, 16
        %v704 = vld [vmem:[%s703] sm:$0xf]
        %v705 = vrot.slane %v376, 4
        %v706 = vrot.slane %v377, 4
        %v707 = vsel %vm390, %v705, %v706
        %v708 = vsel %vm387, %v707, 0
        %v711 = vsel %vm390, %v704, 0
        %713 = vmatprep.subr.mxu0 0.0
        %714 = vmatpush1.msra.mxu0 %v711
        %715 = vmatprep.subr.mxu0 0.0
        %716 = vmatpush1.msra.mxu0 0.0
        %717 = vmatprep.subr.mxu0 0.0
        %718 = vmatpush1.msra.mxu0 0.0
        %719 = vmatprep.subr.mxu0 0.0
        %720 = vmatpush1.msra.mxu0 0.0
        %721 = vmatprep.subr.mxu0 0.0
        %722 = vmatpush1.msra.mxu0 0.0
        %723 = vmatprep.subr.mxu0 0.0
        %724 = vmatpush1.msra.mxu0 0.0
        %725 = vmatprep.subr.mxu0 0.0
        %726 = vmatpush1.msra.mxu0 0.0
        %727 = vmatprep.subr.mxu0 0.0
        %728 = vmatpush1.msra.mxu0 0.0
        %729 = vmatprep.subr.mxu0 0.0
        %730 = vmatpush1.msra.mxu0 0.0
        %731 = vmatprep.subr.mxu0 0.0
        %732 = vmatpush1.msra.mxu0 0.0
        %733 = vmatprep.subr.mxu0 0.0
        %734 = vmatpush1.msra.mxu0 0.0
        %735 = vmatprep.subr.mxu0 0.0
        %736 = vmatpush1.msra.mxu0 0.0
        %737 = vmatprep.subr.mxu0 0.0
        %738 = vmatpush1.msra.mxu0 0.0
        %739 = vmatprep.subr.mxu0 0.0
        %740 = vmatpush1.msra.mxu0 0.0
        %741 = vmatprep.subr.mxu0 0.0
        %742 = vmatpush1.msra.mxu0 0.0
        %743 = vmatprep.subr.mxu0 0.0
        %744 = vmatpush1.msra.mxu0 0.0
        %745 = vmatprep.subr.mxu0 0.0
        %746 = vmatpush1.msra.mxu0 0.0
        %747 = vmatprep.subr.mxu0 0.0
        %748 = vmatpush1.msra.mxu0 0.0
        %749 = vmatprep.subr.mxu0 0.0
        %750 = vmatpush1.msra.mxu0 0.0
        %751 = vmatprep.subr.mxu0 0.0
        %752 = vmatpush1.msra.mxu0 0.0
        %753 = vmatprep.subr.mxu0 0.0
        %754 = vmatpush1.msra.mxu0 0.0
        %755 = vmatprep.subr.mxu0 0.0
        %756 = vmatpush1.msra.mxu0 0.0
        %757 = vmatprep.subr.mxu0 0.0
        %758 = vmatpush1.msra.mxu0 0.0
        %759 = vmatprep.subr.mxu0 0.0
        %760 = vmatpush1.msra.mxu0 0.0
        %761 = vmatprep.subr.mxu0 0.0
        %762 = vmatpush1.msra.mxu0 0.0
        %763 = vmatprep.subr.mxu0 0.0
        %764 = vmatpush1.msra.mxu0 0.0
        %765 = vmatprep.subr.mxu0 0.0
        %766 = vmatpush1.msra.mxu0 0.0
        %767 = vmatprep.subr.mxu0 0.0
        %768 = vmatpush1.msra.mxu0 0.0
        %769 = vmatprep.subr.mxu0 0.0
        %770 = vmatpush1.msra.mxu0 0.0
        %771 = vmatprep.subr.mxu0 0.0
        %772 = vmatpush1.msra.mxu0 0.0
        %773 = vmatprep.subr.mxu0 0.0
        %774 = vmatpush1.msra.mxu0 0.0
        %775 = vmatprep.subr.mxu0 0.0
        %776 = vmatpush1.msra.mxu0 0.0
        %777 = vmatprep.mubr.f32.mxu0 0.0
        %778 = vmatmul.mubr.f32.gmra.mrb[0].mxu0 %v708
        %v779 = vpop.f32.mrb[0].mxu0
        %v780 = vadd.f32 0.0, %v779
        %v781 = vpop.f32.mrb[0].mxu0
        %782 = vdwg.mxu0
        %v783 = vadd.f32 %v702, %v780
        %s784 = scalar_lea.vmem %s3, 20
        %v785 = vld [vmem:[%s784] sm:$0xf]
        %v786 = vrot.slane %v376, 5
        %v787 = vrot.slane %v377, 5
        %v788 = vsel %vm288, %v786, %v787
        %v789 = vsel %vm387, %v788, 0
        %v792 = vsel %vm390, %v785, 0
        %794 = vmatprep.subr.mxu0 0.0
        %795 = vmatpush1.msra.mxu0 %v792
        %796 = vmatprep.subr.mxu0 0.0
        %797 = vmatpush1.msra.mxu0 0.0
        %798 = vmatprep.subr.mxu0 0.0
        %799 = vmatpush1.msra.mxu0 0.0
        %800 = vmatprep.subr.mxu0 0.0
        %801 = vmatpush1.msra.mxu0 0.0
        %802 = vmatprep.subr.mxu0 0.0
        %803 = vmatpush1.msra.mxu0 0.0
        %804 = vmatprep.subr.mxu0 0.0
        %805 = vmatpush1.msra.mxu0 0.0
        %806 = vmatprep.subr.mxu0 0.0
        %807 = vmatpush1.msra.mxu0 0.0
        %808 = vmatprep.subr.mxu0 0.0
        %809 = vmatpush1.msra.mxu0 0.0
        %810 = vmatprep.subr.mxu0 0.0
        %811 = vmatpush1.msra.mxu0 0.0
        %812 = vmatprep.subr.mxu0 0.0
        %813 = vmatpush1.msra.mxu0 0.0
        %814 = vmatprep.subr.mxu0 0.0
        %815 = vmatpush1.msra.mxu0 0.0
        %816 = vmatprep.subr.mxu0 0.0
        %817 = vmatpush1.msra.mxu0 0.0
        %818 = vmatprep.subr.mxu0 0.0
        %819 = vmatpush1.msra.mxu0 0.0
        %820 = vmatprep.subr.mxu0 0.0
        %821 = vmatpush1.msra.mxu0 0.0
        %822 = vmatprep.subr.mxu0 0.0
        %823 = vmatpush1.msra.mxu0 0.0
        %824 = vmatprep.subr.mxu0 0.0
        %825 = vmatpush1.msra.mxu0 0.0
        %826 = vmatprep.subr.mxu0 0.0
        %827 = vmatpush1.msra.mxu0 0.0
        %828 = vmatprep.subr.mxu0 0.0
        %829 = vmatpush1.msra.mxu0 0.0
        %830 = vmatprep.subr.mxu0 0.0
        %831 = vmatpush1.msra.mxu0 0.0
        %832 = vmatprep.subr.mxu0 0.0
        %833 = vmatpush1.msra.mxu0 0.0
        %834 = vmatprep.subr.mxu0 0.0
        %835 = vmatpush1.msra.mxu0 0.0
        %836 = vmatprep.subr.mxu0 0.0
        %837 = vmatpush1.msra.mxu0 0.0
        %838 = vmatprep.subr.mxu0 0.0
        %839 = vmatpush1.msra.mxu0 0.0
        %840 = vmatprep.subr.mxu0 0.0
        %841 = vmatpush1.msra.mxu0 0.0
        %842 = vmatprep.subr.mxu0 0.0
        %843 = vmatpush1.msra.mxu0 0.0
        %844 = vmatprep.subr.mxu0 0.0
        %845 = vmatpush1.msra.mxu0 0.0
        %846 = vmatprep.subr.mxu0 0.0
        %847 = vmatpush1.msra.mxu0 0.0
        %848 = vmatprep.subr.mxu0 0.0
        %849 = vmatpush1.msra.mxu0 0.0
        %850 = vmatprep.subr.mxu0 0.0
        %851 = vmatpush1.msra.mxu0 0.0
        %852 = vmatprep.subr.mxu0 0.0
        %853 = vmatpush1.msra.mxu0 0.0
        %854 = vmatprep.subr.mxu0 0.0
        %855 = vmatpush1.msra.mxu0 0.0
        %856 = vmatprep.subr.mxu0 0.0
        %857 = vmatpush1.msra.mxu0 0.0
        %858 = vmatprep.mubr.f32.mxu0 0.0
        %859 = vmatmul.mubr.f32.gmra.mrb[0].mxu0 %v789
        %v860 = vpop.f32.mrb[0].mxu0
        %v861 = vadd.f32 0.0, %v860
        %v862 = vpop.f32.mrb[0].mxu0
        %863 = vdwg.mxu0
        %v864 = vadd.f32 %v783, %v861
        %s865 = scalar_lea.vmem %s3, 24
        %v866 = vld [vmem:[%s865] sm:$0xf]
        %vm867 = vcmask 1041408
        %v868 = vrot.slane %v376, 6
        %v869 = vrot.slane %v377, 6
        %v870 = vsel %vm867, %v868, %v869
        %v871 = vsel %vm387, %v870, 0
        %v874 = vsel %vm390, %v866, 0
        %876 = vmatprep.subr.mxu0 0.0
        %877 = vmatpush1.msra.mxu0 %v874
        %878 = vmatprep.subr.mxu0 0.0
        %879 = vmatpush1.msra.mxu0 0.0
        %880 = vmatprep.subr.mxu0 0.0
        %881 = vmatpush1.msra.mxu0 0.0
        %882 = vmatprep.subr.mxu0 0.0
        %883 = vmatpush1.msra.mxu0 0.0
        %884 = vmatprep.subr.mxu0 0.0
        %885 = vmatpush1.msra.mxu0 0.0
        %886 = vmatprep.subr.mxu0 0.0
        %887 = vmatpush1.msra.mxu0 0.0
        %888 = vmatprep.subr.mxu0 0.0
        %889 = vmatpush1.msra.mxu0 0.0
        %890 = vmatprep.subr.mxu0 0.0
        %891 = vmatpush1.msra.mxu0 0.0
        %892 = vmatprep.subr.mxu0 0.0
        %893 = vmatpush1.msra.mxu0 0.0
        %894 = vmatprep.subr.mxu0 0.0
        %895 = vmatpush1.msra.mxu0 0.0
        %896 = vmatprep.subr.mxu0 0.0
        %897 = vmatpush1.msra.mxu0 0.0
        %898 = vmatprep.subr.mxu0 0.0
        %899 = vmatpush1.msra.mxu0 0.0
        %900 = vmatprep.subr.mxu0 0.0
        %901 = vmatpush1.msra.mxu0 0.0
        %902 = vmatprep.subr.mxu0 0.0
        %903 = vmatpush1.msra.mxu0 0.0
        %904 = vmatprep.subr.mxu0 0.0
        %905 = vmatpush1.msra.mxu0 0.0
        %906 = vmatprep.subr.mxu0 0.0
        %907 = vmatpush1.msra.mxu0 0.0
        %908 = vmatprep.subr.mxu0 0.0
        %909 = vmatpush1.msra.mxu0 0.0
        %910 = vmatprep.subr.mxu0 0.0
        %911 = vmatpush1.msra.mxu0 0.0
        %912 = vmatprep.subr.mxu0 0.0
        %913 = vmatpush1.msra.mxu0 0.0
        %914 = vmatprep.subr.mxu0 0.0
        %915 = vmatpush1.msra.mxu0 0.0
        %916 = vmatprep.subr.mxu0 0.0
        %917 = vmatpush1.msra.mxu0 0.0
        %918 = vmatprep.subr.mxu0 0.0
        %919 = vmatpush1.msra.mxu0 0.0
        %920 = vmatprep.subr.mxu0 0.0
        %921 = vmatpush1.msra.mxu0 0.0
        %922 = vmatprep.subr.mxu0 0.0
        %923 = vmatpush1.msra.mxu0 0.0
        %924 = vmatprep.subr.mxu0 0.0
        %925 = vmatpush1.msra.mxu0 0.0
        %926 = vmatprep.subr.mxu0 0.0
        %927 = vmatpush1.msra.mxu0 0.0
        %928 = vmatprep.subr.mxu0 0.0
        %929 = vmatpush1.msra.mxu0 0.0
        %930 = vmatprep.subr.mxu0 0.0
        %931 = vmatpush1.msra.mxu0 0.0
        %932 = vmatprep.subr.mxu0 0.0
        %933 = vmatpush1.msra.mxu0 0.0
        %934 = vmatprep.subr.mxu0 0.0
        %935 = vmatpush1.msra.mxu0 0.0
        %936 = vmatprep.subr.mxu0 0.0
        %937 = vmatpush1.msra.mxu0 0.0
        %938 = vmatprep.subr.mxu0 0.0
        %939 = vmatpush1.msra.mxu0 0.0
        %940 = vmatprep.mubr.f32.mxu0 0.0
        %941 = vmatmul.mubr.f32.gmra.mrb[0].mxu0 %v871
        %v942 = vpop.f32.mrb[0].mxu0
        %v943 = vadd.f32 0.0, %v942
        %v944 = vpop.f32.mrb[0].mxu0
        %945 = vdwg.mxu0
        %v946 = vadd.f32 %v864, %v943
        %v947 = vld [vmem:[%s4] sm:$0x1]
        %v949 = vlaneseq
        %v950 = vshrl.u32 %v949, 7
        %v951 = vsub.s32 0, %v950
        %v952 = vrot.slane %v947, %v951
        %v954 = vadd.f32 %v946, %v952
        %vm955 = vcmp.ge.f32.partialorder %v954, 0.0
        %v956 = vmul.f32 %v954, 0.1
        %v957 = vsel %vm955, %v954, %v956
        %v958 = vlaneseq
        %v959 = vshrl.u32 %v958, 7
        %v960 = vsub.s32 0, %v959
        %v961 = vrot.slane %v957, %v960
        %v962 = vlaneseq
        %v963 = vshrl.u32 %v962, 7
        %v964 = vsub.s32 7, %v963
        %v965 = vrot.slane %v957, %v964
        %v967 = vrot.slane %v957, 5
        %v969 = vsel %vm288, %v961, %v967
        %v970 = vsel %vm288, %v967, %v965
        %v971 = vld [vmem:[%s5] sm:$0xff]
        %s972 = scalar_lea.vmem %s5, 8
        %v973 = vld [vmem:[%s972] sm:$0xff]
        %v976 = vrot.slane %v969, 1
        %v977 = vrot.slane %v970, 1
        %v978 = vsel %vm383, %v976, %v977
        %vm979 = vcmask 64512
        %v980 = vsel %vm979, %v978, 0
        %982 = vmatprep.subr.mxu0 0.0
        %983 = vmatpush1.msra.mxu0 %v973
        %984 = vmatprep.subr.mxu0 0.0
        %985 = vmatpush1.msra.mxu0 0.0
        %986 = vmatprep.subr.mxu0 0.0
        %987 = vmatpush1.msra.mxu0 0.0
        %988 = vmatprep.subr.mxu0 0.0
        %989 = vmatpush1.msra.mxu0 0.0
        %990 = vmatprep.subr.mxu0 0.0
        %991 = vmatpush1.msra.mxu0 0.0
        %992 = vmatprep.subr.mxu0 0.0
        %993 = vmatpush1.msra.mxu0 0.0
        %994 = vmatprep.subr.mxu0 0.0
        %995 = vmatpush1.msra.mxu0 0.0
        %996 = vmatprep.subr.mxu0 0.0
        %997 = vmatpush1.msra.mxu0 0.0
        %998 = vmatprep.subr.mxu0 0.0
        %999 = vmatpush1.msra.mxu0 0.0
        %1000 = vmatprep.subr.mxu0 0.0
        %1001 = vmatpush1.msra.mxu0 0.0
        %1002 = vmatprep.subr.mxu0 0.0
        %1003 = vmatpush1.msra.mxu0 0.0
        %1004 = vmatprep.subr.mxu0 0.0
        %1005 = vmatpush1.msra.mxu0 0.0
        %1006 = vmatprep.subr.mxu0 0.0
        %1007 = vmatpush1.msra.mxu0 0.0
        %1008 = vmatprep.subr.mxu0 0.0
        %1009 = vmatpush1.msra.mxu0 0.0
        %1010 = vmatprep.subr.mxu0 0.0
        %1011 = vmatpush1.msra.mxu0 0.0
        %1012 = vmatprep.subr.mxu0 0.0
        %1013 = vmatpush1.msra.mxu0 0.0
        %1014 = vmatprep.subr.mxu0 0.0
        %1015 = vmatpush1.msra.mxu0 0.0
        %1016 = vmatprep.subr.mxu0 0.0
        %1017 = vmatpush1.msra.mxu0 0.0
        %1018 = vmatprep.subr.mxu0 0.0
        %1019 = vmatpush1.msra.mxu0 0.0
        %1020 = vmatprep.subr.mxu0 0.0
        %1021 = vmatpush1.msra.mxu0 0.0
        %1022 = vmatprep.subr.mxu0 0.0
        %1023 = vmatpush1.msra.mxu0 0.0
        %1024 = vmatprep.subr.mxu0 0.0
        %1025 = vmatpush1.msra.mxu0 0.0
        %1026 = vmatprep.subr.mxu0 0.0
        %1027 = vmatpush1.msra.mxu0 0.0
        %1028 = vmatprep.subr.mxu0 0.0
        %1029 = vmatpush1.msra.mxu0 0.0
        %1030 = vmatprep.subr.mxu0 0.0
        %1031 = vmatpush1.msra.mxu0 0.0
        %1032 = vmatprep.subr.mxu0 0.0
        %1033 = vmatpush1.msra.mxu0 0.0
        %1034 = vmatprep.subr.mxu0 0.0
        %1035 = vmatpush1.msra.mxu0 0.0
        %1036 = vmatprep.subr.mxu0 0.0
        %1037 = vmatpush1.msra.mxu0 0.0
        %1038 = vmatprep.subr.mxu0 0.0
        %1039 = vmatpush1.msra.mxu0 0.0
        %1040 = vmatprep.subr.mxu0 0.0
        %1041 = vmatpush1.msra.mxu0 0.0
        %1042 = vmatprep.subr.mxu0 0.0
        %1043 = vmatpush1.msra.mxu0 0.0
        %1044 = vmatprep.subr.mxu0 0.0
        %1045 = vmatpush1.msra.mxu0 0.0
        %1046 = vmatprep.mubr.f32.mxu0 0.0
        %1047 = vmatmul.mubr.f32.gmra.mrb[0].mxu0 %v980
        %v1048 = vpop.f32.mrb[0].mxu0
        %v1049 = vadd.f32 0.0, %v1048
        %v1050 = vpop.f32.mrb[0].mxu0
        %1051 = vdwg.mxu0
        %v1052 = vsel %vm979, %v969, 0
        %1054 = vmatprep.subr.mxu0 0.0
        %1055 = vmatpush1.msra.mxu0 %v971
        %1056 = vmatprep.subr.mxu0 0.0
        %1057 = vmatpush1.msra.mxu0 0.0
        %1058 = vmatprep.subr.mxu0 0.0
        %1059 = vmatpush1.msra.mxu0 0.0
        %1060 = vmatprep.subr.mxu0 0.0
        %1061 = vmatpush1.msra.mxu0 0.0
        %1062 = vmatprep.subr.mxu0 0.0
        %1063 = vmatpush1.msra.mxu0 0.0
        %1064 = vmatprep.subr.mxu0 0.0
        %1065 = vmatpush1.msra.mxu0 0.0
        %1066 = vmatprep.subr.mxu0 0.0
        %1067 = vmatpush1.msra.mxu0 0.0
        %1068 = vmatprep.subr.mxu0 0.0
        %1069 = vmatpush1.msra.mxu0 0.0
        %1070 = vmatprep.subr.mxu0 0.0
        %1071 = vmatpush1.msra.mxu0 0.0
        %1072 = vmatprep.subr.mxu0 0.0
        %1073 = vmatpush1.msra.mxu0 0.0
        %1074 = vmatprep.subr.mxu0 0.0
        %1075 = vmatpush1.msra.mxu0 0.0
        %1076 = vmatprep.subr.mxu0 0.0
        %1077 = vmatpush1.msra.mxu0 0.0
        %1078 = vmatprep.subr.mxu0 0.0
        %1079 = vmatpush1.msra.mxu0 0.0
        %1080 = vmatprep.subr.mxu0 0.0
        %1081 = vmatpush1.msra.mxu0 0.0
        %1082 = vmatprep.subr.mxu0 0.0
        %1083 = vmatpush1.msra.mxu0 0.0
        %1084 = vmatprep.subr.mxu0 0.0
        %1085 = vmatpush1.msra.mxu0 0.0
        %1086 = vmatprep.subr.mxu0 0.0
        %1087 = vmatpush1.msra.mxu0 0.0
        %1088 = vmatprep.subr.mxu0 0.0
        %1089 = vmatpush1.msra.mxu0 0.0
        %1090 = vmatprep.subr.mxu0 0.0
        %1091 = vmatpush1.msra.mxu0 0.0
        %1092 = vmatprep.subr.mxu0 0.0
        %1093 = vmatpush1.msra.mxu0 0.0
        %1094 = vmatprep.subr.mxu0 0.0
        %1095 = vmatpush1.msra.mxu0 0.0
        %1096 = vmatprep.subr.mxu0 0.0
        %1097 = vmatpush1.msra.mxu0 0.0
        %1098 = vmatprep.subr.mxu0 0.0
        %1099 = vmatpush1.msra.mxu0 0.0
        %1100 = vmatprep.subr.mxu0 0.0
        %1101 = vmatpush1.msra.mxu0 0.0
        %1102 = vmatprep.subr.mxu0 0.0
        %1103 = vmatpush1.msra.mxu0 0.0
        %1104 = vmatprep.subr.mxu0 0.0
        %1105 = vmatpush1.msra.mxu0 0.0
        %1106 = vmatprep.subr.mxu0 0.0
        %1107 = vmatpush1.msra.mxu0 0.0
        %1108 = vmatprep.subr.mxu0 0.0
        %1109 = vmatpush1.msra.mxu0 0.0
        %1110 = vmatprep.subr.mxu0 0.0
        %1111 = vmatpush1.msra.mxu0 0.0
        %1112 = vmatprep.subr.mxu0 0.0
        %1113 = vmatpush1.msra.mxu0 0.0
        %1114 = vmatprep.subr.mxu0 0.0
        %1115 = vmatpush1.msra.mxu0 0.0
        %1116 = vmatprep.subr.mxu0 0.0
        %1117 = vmatpush1.msra.mxu0 0.0
        %1118 = vmatprep.mubr.f32.mxu0 0.0
        %1119 = vmatmul.mubr.f32.gmra.mrb[0].mxu0 %v1052
        %v1120 = vpop.f32.mrb[0].mxu0
        %v1121 = vadd.f32 %v1049, %v1120
        %v1122 = vpop.f32.mrb[0].mxu0
        %1123 = vdwg.mxu0
        %s1124 = scalar_lea.vmem %s5, 16
        %v1125 = vld [vmem:[%s1124] sm:$0xff]
        %v1126 = vrot.slane %v969, 2
        %v1127 = vrot.slane %v970, 2
        %v1128 = vsel %vm541, %v1126, %v1127
        %v1129 = vsel %vm979, %v1128, 0
        %1131 = vmatprep.subr.mxu0 0.0
        %1132 = vmatpush1.msra.mxu0 %v1125
        %1133 = vmatprep.subr.mxu0 0.0
        %1134 = vmatpush1.msra.mxu0 0.0
        %1135 = vmatprep.subr.mxu0 0.0
        %1136 = vmatpush1.msra.mxu0 0.0
        %1137 = vmatprep.subr.mxu0 0.0
        %1138 = vmatpush1.msra.mxu0 0.0
        %1139 = vmatprep.subr.mxu0 0.0
        %1140 = vmatpush1.msra.mxu0 0.0
        %1141 = vmatprep.subr.mxu0 0.0
        %1142 = vmatpush1.msra.mxu0 0.0
        %1143 = vmatprep.subr.mxu0 0.0
        %1144 = vmatpush1.msra.mxu0 0.0
        %1145 = vmatprep.subr.mxu0 0.0
        %1146 = vmatpush1.msra.mxu0 0.0
        %1147 = vmatprep.subr.mxu0 0.0
        %1148 = vmatpush1.msra.mxu0 0.0
        %1149 = vmatprep.subr.mxu0 0.0
        %1150 = vmatpush1.msra.mxu0 0.0
        %1151 = vmatprep.subr.mxu0 0.0
        %1152 = vmatpush1.msra.mxu0 0.0
        %1153 = vmatprep.subr.mxu0 0.0
        %1154 = vmatpush1.msra.mxu0 0.0
        %1155 = vmatprep.subr.mxu0 0.0
        %1156 = vmatpush1.msra.mxu0 0.0
        %1157 = vmatprep.subr.mxu0 0.0
        %1158 = vmatpush1.msra.mxu0 0.0
        %1159 = vmatprep.subr.mxu0 0.0
        %1160 = vmatpush1.msra.mxu0 0.0
        %1161 = vmatprep.subr.mxu0 0.0
        %1162 = vmatpush1.msra.mxu0 0.0
        %1163 = vmatprep.subr.mxu0 0.0
        %1164 = vmatpush1.msra.mxu0 0.0
        %1165 = vmatprep.subr.mxu0 0.0
        %1166 = vmatpush1.msra.mxu0 0.0
        %1167 = vmatprep.subr.mxu0 0.0
        %1168 = vmatpush1.msra.mxu0 0.0
        %1169 = vmatprep.subr.mxu0 0.0
        %1170 = vmatpush1.msra.mxu0 0.0
        %1171 = vmatprep.subr.mxu0 0.0
        %1172 = vmatpush1.msra.mxu0 0.0
        %1173 = vmatprep.subr.mxu0 0.0
        %1174 = vmatpush1.msra.mxu0 0.0
        %1175 = vmatprep.subr.mxu0 0.0
        %1176 = vmatpush1.msra.mxu0 0.0
        %1177 = vmatprep.subr.mxu0 0.0
        %1178 = vmatpush1.msra.mxu0 0.0
        %1179 = vmatprep.subr.mxu0 0.0
        %1180 = vmatpush1.msra.mxu0 0.0
        %1181 = vmatprep.subr.mxu0 0.0
        %1182 = vmatpush1.msra.mxu0 0.0
        %1183 = vmatprep.subr.mxu0 0.0
        %1184 = vmatpush1.msra.mxu0 0.0
        %1185 = vmatprep.subr.mxu0 0.0
        %1186 = vmatpush1.msra.mxu0 0.0
        %1187 = vmatprep.subr.mxu0 0.0
        %1188 = vmatpush1.msra.mxu0 0.0
        %1189 = vmatprep.subr.mxu0 0.0
        %1190 = vmatpush1.msra.mxu0 0.0
        %1191 = vmatprep.subr.mxu0 0.0
        %1192 = vmatpush1.msra.mxu0 0.0
        %1193 = vmatprep.subr.mxu0 0.0
        %1194 = vmatpush1.msra.mxu0 0.0
        %1195 = vmatprep.mubr.f32.mxu0 0.0
        %1196 = vmatmul.mubr.f32.gmra.mrb[0].mxu0 %v1129
        %v1197 = vpop.f32.mrb[0].mxu0
        %v1198 = vadd.f32 0.0, %v1197
        %v1199 = vpop.f32.mrb[0].mxu0
        %1200 = vdwg.mxu0
        %v1201 = vadd.f32 %v1121, %v1198
        %s1202 = scalar_lea.vmem %s5, 24
        %v1203 = vld [vmem:[%s1202] sm:$0xff]
        %v1204 = vrot.slane %v969, 3
        %v1205 = vrot.slane %v970, 3
        %v1206 = vsel %vm623, %v1204, %v1205
        %v1207 = vsel %vm979, %v1206, 0
        %1209 = vmatprep.subr.mxu0 0.0
        %1210 = vmatpush1.msra.mxu0 %v1203
        %1211 = vmatprep.subr.mxu0 0.0
        %1212 = vmatpush1.msra.mxu0 0.0
        %1213 = vmatprep.subr.mxu0 0.0
        %1214 = vmatpush1.msra.mxu0 0.0
        %1215 = vmatprep.subr.mxu0 0.0
        %1216 = vmatpush1.msra.mxu0 0.0
        %1217 = vmatprep.subr.mxu0 0.0
        %1218 = vmatpush1.msra.mxu0 0.0
        %1219 = vmatprep.subr.mxu0 0.0
        %1220 = vmatpush1.msra.mxu0 0.0
        %1221 = vmatprep.subr.mxu0 0.0
        %1222 = vmatpush1.msra.mxu0 0.0
        %1223 = vmatprep.subr.mxu0 0.0
        %1224 = vmatpush1.msra.mxu0 0.0
        %1225 = vmatprep.subr.mxu0 0.0
        %1226 = vmatpush1.msra.mxu0 0.0
        %1227 = vmatprep.subr.mxu0 0.0
        %1228 = vmatpush1.msra.mxu0 0.0
        %1229 = vmatprep.subr.mxu0 0.0
        %1230 = vmatpush1.msra.mxu0 0.0
        %1231 = vmatprep.subr.mxu0 0.0
        %1232 = vmatpush1.msra.mxu0 0.0
        %1233 = vmatprep.subr.mxu0 0.0
        %1234 = vmatpush1.msra.mxu0 0.0
        %1235 = vmatprep.subr.mxu0 0.0
        %1236 = vmatpush1.msra.mxu0 0.0
        %1237 = vmatprep.subr.mxu0 0.0
        %1238 = vmatpush1.msra.mxu0 0.0
        %1239 = vmatprep.subr.mxu0 0.0
        %1240 = vmatpush1.msra.mxu0 0.0
        %1241 = vmatprep.subr.mxu0 0.0
        %1242 = vmatpush1.msra.mxu0 0.0
        %1243 = vmatprep.subr.mxu0 0.0
        %1244 = vmatpush1.msra.mxu0 0.0
        %1245 = vmatprep.subr.mxu0 0.0
        %1246 = vmatpush1.msra.mxu0 0.0
        %1247 = vmatprep.subr.mxu0 0.0
        %1248 = vmatpush1.msra.mxu0 0.0
        %1249 = vmatprep.subr.mxu0 0.0
        %1250 = vmatpush1.msra.mxu0 0.0
        %1251 = vmatprep.subr.mxu0 0.0
        %1252 = vmatpush1.msra.mxu0 0.0
        %1253 = vmatprep.subr.mxu0 0.0
        %1254 = vmatpush1.msra.mxu0 0.0
        %1255 = vmatprep.subr.mxu0 0.0
        %1256 = vmatpush1.msra.mxu0 0.0
        %1257 = vmatprep.subr.mxu0 0.0
        %1258 = vmatpush1.msra.mxu0 0.0
        %1259 = vmatprep.subr.mxu0 0.0
        %1260 = vmatpush1.msra.mxu0 0.0
        %1261 = vmatprep.subr.mxu0 0.0
        %1262 = vmatpush1.msra.mxu0 0.0
        %1263 = vmatprep.subr.mxu0 0.0
        %1264 = vmatpush1.msra.mxu0 0.0
        %1265 = vmatprep.subr.mxu0 0.0
        %1266 = vmatpush1.msra.mxu0 0.0
        %1267 = vmatprep.subr.mxu0 0.0
        %1268 = vmatpush1.msra.mxu0 0.0
        %1269 = vmatprep.subr.mxu0 0.0
        %1270 = vmatpush1.msra.mxu0 0.0
        %1271 = vmatprep.subr.mxu0 0.0
        %1272 = vmatpush1.msra.mxu0 0.0
        %1273 = vmatprep.mubr.f32.mxu0 0.0
        %1274 = vmatmul.mubr.f32.gmra.mrb[0].mxu0 %v1207
        %v1275 = vpop.f32.mrb[0].mxu0
        %v1276 = vadd.f32 0.0, %v1275
        %v1277 = vpop.f32.mrb[0].mxu0
        %1278 = vdwg.mxu0
        %v1279 = vadd.f32 %v1201, %v1276
        %s1280 = scalar_lea.vmem %s5, 32
        %v1281 = vld [vmem:[%s1280] sm:$0xff]
        %v1282 = vrot.slane %v969, 4
        %v1283 = vrot.slane %v970, 4
        %v1284 = vsel %vm390, %v1282, %v1283
        %v1285 = vsel %vm979, %v1284, 0
        %1287 = vmatprep.subr.mxu0 0.0
        %1288 = vmatpush1.msra.mxu0 %v1281
        %1289 = vmatprep.subr.mxu0 0.0
        %1290 = vmatpush1.msra.mxu0 0.0
        %1291 = vmatprep.subr.mxu0 0.0
        %1292 = vmatpush1.msra.mxu0 0.0
        %1293 = vmatprep.subr.mxu0 0.0
        %1294 = vmatpush1.msra.mxu0 0.0
        %1295 = vmatprep.subr.mxu0 0.0
        %1296 = vmatpush1.msra.mxu0 0.0
        %1297 = vmatprep.subr.mxu0 0.0
        %1298 = vmatpush1.msra.mxu0 0.0
        %1299 = vmatprep.subr.mxu0 0.0
        %1300 = vmatpush1.msra.mxu0 0.0
        %1301 = vmatprep.subr.mxu0 0.0
        %1302 = vmatpush1.msra.mxu0 0.0
        %1303 = vmatprep.subr.mxu0 0.0
        %1304 = vmatpush1.msra.mxu0 0.0
        %1305 = vmatprep.subr.mxu0 0.0
        %1306 = vmatpush1.msra.mxu0 0.0
        %1307 = vmatprep.subr.mxu0 0.0
        %1308 = vmatpush1.msra.mxu0 0.0
        %1309 = vmatprep.subr.mxu0 0.0
        %1310 = vmatpush1.msra.mxu0 0.0
        %1311 = vmatprep.subr.mxu0 0.0
        %1312 = vmatpush1.msra.mxu0 0.0
        %1313 = vmatprep.subr.mxu0 0.0
        %1314 = vmatpush1.msra.mxu0 0.0
        %1315 = vmatprep.subr.mxu0 0.0
        %1316 = vmatpush1.msra.mxu0 0.0
        %1317 = vmatprep.subr.mxu0 0.0
        %1318 = vmatpush1.msra.mxu0 0.0
        %1319 = vmatprep.subr.mxu0 0.0
        %1320 = vmatpush1.msra.mxu0 0.0
        %1321 = vmatprep.subr.mxu0 0.0
        %1322 = vmatpush1.msra.mxu0 0.0
        %1323 = vmatprep.subr.mxu0 0.0
        %1324 = vmatpush1.msra.mxu0 0.0
        %1325 = vmatprep.subr.mxu0 0.0
        %1326 = vmatpush1.msra.mxu0 0.0
        %1327 = vmatprep.subr.mxu0 0.0
        %1328 = vmatpush1.msra.mxu0 0.0
        %1329 = vmatprep.subr.mxu0 0.0
        %1330 = vmatpush1.msra.mxu0 0.0
        %1331 = vmatprep.subr.mxu0 0.0
        %1332 = vmatpush1.msra.mxu0 0.0
        %1333 = vmatprep.subr.mxu0 0.0
        %1334 = vmatpush1.msra.mxu0 0.0
        %1335 = vmatprep.subr.mxu0 0.0
        %1336 = vmatpush1.msra.mxu0 0.0
        %1337 = vmatprep.subr.mxu0 0.0
        %1338 = vmatpush1.msra.mxu0 0.0
        %1339 = vmatprep.subr.mxu0 0.0
        %1340 = vmatpush1.msra.mxu0 0.0
        %1341 = vmatprep.subr.mxu0 0.0
        %1342 = vmatpush1.msra.mxu0 0.0
        %1343 = vmatprep.subr.mxu0 0.0
        %1344 = vmatpush1.msra.mxu0 0.0
        %1345 = vmatprep.subr.mxu0 0.0
        %1346 = vmatpush1.msra.mxu0 0.0
        %1347 = vmatprep.subr.mxu0 0.0
        %1348 = vmatpush1.msra.mxu0 0.0
        %1349 = vmatprep.subr.mxu0 0.0
        %1350 = vmatpush1.msra.mxu0 0.0
        %1351 = vmatprep.mubr.f32.mxu0 0.0
        %1352 = vmatmul.mubr.f32.gmra.mrb[0].mxu0 %v1285
        %v1353 = vpop.f32.mrb[0].mxu0
        %v1354 = vadd.f32 0.0, %v1353
        %v1355 = vpop.f32.mrb[0].mxu0
        %1356 = vdwg.mxu0
        %v1357 = vadd.f32 %v1279, %v1354
        %s1358 = scalar_lea.vmem %s5, 40
        %v1359 = vld [vmem:[%s1358] sm:$0xff]
        %v1360 = vrot.slane %v969, 5
        %v1361 = vrot.slane %v970, 5
        %v1362 = vsel %vm288, %v1360, %v1361
        %v1363 = vsel %vm979, %v1362, 0
        %1365 = vmatprep.subr.mxu0 0.0
        %1366 = vmatpush1.msra.mxu0 %v1359
        %1367 = vmatprep.subr.mxu0 0.0
        %1368 = vmatpush1.msra.mxu0 0.0
        %1369 = vmatprep.subr.mxu0 0.0
        %1370 = vmatpush1.msra.mxu0 0.0
        %1371 = vmatprep.subr.mxu0 0.0
        %1372 = vmatpush1.msra.mxu0 0.0
        %1373 = vmatprep.subr.mxu0 0.0
        %1374 = vmatpush1.msra.mxu0 0.0
        %1375 = vmatprep.subr.mxu0 0.0
        %1376 = vmatpush1.msra.mxu0 0.0
        %1377 = vmatprep.subr.mxu0 0.0
        %1378 = vmatpush1.msra.mxu0 0.0
        %1379 = vmatprep.subr.mxu0 0.0
        %1380 = vmatpush1.msra.mxu0 0.0
        %1381 = vmatprep.subr.mxu0 0.0
        %1382 = vmatpush1.msra.mxu0 0.0
        %1383 = vmatprep.subr.mxu0 0.0
        %1384 = vmatpush1.msra.mxu0 0.0
        %1385 = vmatprep.subr.mxu0 0.0
        %1386 = vmatpush1.msra.mxu0 0.0
        %1387 = vmatprep.subr.mxu0 0.0
        %1388 = vmatpush1.msra.mxu0 0.0
        %1389 = vmatprep.subr.mxu0 0.0
        %1390 = vmatpush1.msra.mxu0 0.0
        %1391 = vmatprep.subr.mxu0 0.0
        %1392 = vmatpush1.msra.mxu0 0.0
        %1393 = vmatprep.subr.mxu0 0.0
        %1394 = vmatpush1.msra.mxu0 0.0
        %1395 = vmatprep.subr.mxu0 0.0
        %1396 = vmatpush1.msra.mxu0 0.0
        %1397 = vmatprep.subr.mxu0 0.0
        %1398 = vmatpush1.msra.mxu0 0.0
        %1399 = vmatprep.subr.mxu0 0.0
        %1400 = vmatpush1.msra.mxu0 0.0
        %1401 = vmatprep.subr.mxu0 0.0
        %1402 = vmatpush1.msra.mxu0 0.0
        %1403 = vmatprep.subr.mxu0 0.0
        %1404 = vmatpush1.msra.mxu0 0.0
        %1405 = vmatprep.subr.mxu0 0.0
        %1406 = vmatpush1.msra.mxu0 0.0
        %1407 = vmatprep.subr.mxu0 0.0
        %1408 = vmatpush1.msra.mxu0 0.0
        %1409 = vmatprep.subr.mxu0 0.0
        %1410 = vmatpush1.msra.mxu0 0.0
        %1411 = vmatprep.subr.mxu0 0.0
        %1412 = vmatpush1.msra.mxu0 0.0
        %1413 = vmatprep.subr.mxu0 0.0
        %1414 = vmatpush1.msra.mxu0 0.0
        %1415 = vmatprep.subr.mxu0 0.0
        %1416 = vmatpush1.msra.mxu0 0.0
        %1417 = vmatprep.subr.mxu0 0.0
        %1418 = vmatpush1.msra.mxu0 0.0
        %1419 = vmatprep.subr.mxu0 0.0
        %1420 = vmatpush1.msra.mxu0 0.0
        %1421 = vmatprep.subr.mxu0 0.0
        %1422 = vmatpush1.msra.mxu0 0.0
        %1423 = vmatprep.subr.mxu0 0.0
        %1424 = vmatpush1.msra.mxu0 0.0
        %1425 = vmatprep.subr.mxu0 0.0
        %1426 = vmatpush1.msra.mxu0 0.0
        %1427 = vmatprep.subr.mxu0 0.0
        %1428 = vmatpush1.msra.mxu0 0.0
        %1429 = vmatprep.mubr.f32.mxu0 0.0
        %1430 = vmatmul.mubr.f32.gmra.mrb[0].mxu0 %v1363
        %v1431 = vpop.f32.mrb[0].mxu0
        %v1432 = vadd.f32 0.0, %v1431
        %v1433 = vpop.f32.mrb[0].mxu0
        %1434 = vdwg.mxu0
        %v1435 = vadd.f32 %v1357, %v1432
        %s1436 = scalar_lea.vmem %s5, 48
        %v1437 = vld [vmem:[%s1436] sm:$0xff]
        %v1438 = vrot.slane %v969, 6
        %v1439 = vrot.slane %v970, 6
        %v1440 = vsel %vm867, %v1438, %v1439
        %v1441 = vsel %vm979, %v1440, 0
        %1443 = vmatprep.subr.mxu0 0.0
        %1444 = vmatpush1.msra.mxu0 %v1437
        %1445 = vmatprep.subr.mxu0 0.0
        %1446 = vmatpush1.msra.mxu0 0.0
        %1447 = vmatprep.subr.mxu0 0.0
        %1448 = vmatpush1.msra.mxu0 0.0
        %1449 = vmatprep.subr.mxu0 0.0
        %1450 = vmatpush1.msra.mxu0 0.0
        %1451 = vmatprep.subr.mxu0 0.0
        %1452 = vmatpush1.msra.mxu0 0.0
        %1453 = vmatprep.subr.mxu0 0.0
        %1454 = vmatpush1.msra.mxu0 0.0
        %1455 = vmatprep.subr.mxu0 0.0
        %1456 = vmatpush1.msra.mxu0 0.0
        %1457 = vmatprep.subr.mxu0 0.0
        %1458 = vmatpush1.msra.mxu0 0.0
        %1459 = vmatprep.subr.mxu0 0.0
        %1460 = vmatpush1.msra.mxu0 0.0
        %1461 = vmatprep.subr.mxu0 0.0
        %1462 = vmatpush1.msra.mxu0 0.0
        %1463 = vmatprep.subr.mxu0 0.0
        %1464 = vmatpush1.msra.mxu0 0.0
        %1465 = vmatprep.subr.mxu0 0.0
        %1466 = vmatpush1.msra.mxu0 0.0
        %1467 = vmatprep.subr.mxu0 0.0
        %1468 = vmatpush1.msra.mxu0 0.0
        %1469 = vmatprep.subr.mxu0 0.0
        %1470 = vmatpush1.msra.mxu0 0.0
        %1471 = vmatprep.subr.mxu0 0.0
        %1472 = vmatpush1.msra.mxu0 0.0
        %1473 = vmatprep.subr.mxu0 0.0
        %1474 = vmatpush1.msra.mxu0 0.0
        %1475 = vmatprep.subr.mxu0 0.0
        %1476 = vmatpush1.msra.mxu0 0.0
        %1477 = vmatprep.subr.mxu0 0.0
        %1478 = vmatpush1.msra.mxu0 0.0
        %1479 = vmatprep.subr.mxu0 0.0
        %1480 = vmatpush1.msra.mxu0 0.0
        %1481 = vmatprep.subr.mxu0 0.0
        %1482 = vmatpush1.msra.mxu0 0.0
        %1483 = vmatprep.subr.mxu0 0.0
        %1484 = vmatpush1.msra.mxu0 0.0
        %1485 = vmatprep.subr.mxu0 0.0
        %1486 = vmatpush1.msra.mxu0 0.0
        %1487 = vmatprep.subr.mxu0 0.0
        %1488 = vmatpush1.msra.mxu0 0.0
        %1489 = vmatprep.subr.mxu0 0.0
        %1490 = vmatpush1.msra.mxu0 0.0
        %1491 = vmatprep.subr.mxu0 0.0
        %1492 = vmatpush1.msra.mxu0 0.0
        %1493 = vmatprep.subr.mxu0 0.0
        %1494 = vmatpush1.msra.mxu0 0.0
        %1495 = vmatprep.subr.mxu0 0.0
        %1496 = vmatpush1.msra.mxu0 0.0
        %1497 = vmatprep.subr.mxu0 0.0
        %1498 = vmatpush1.msra.mxu0 0.0
        %1499 = vmatprep.subr.mxu0 0.0
        %1500 = vmatpush1.msra.mxu0 0.0
        %1501 = vmatprep.subr.mxu0 0.0
        %1502 = vmatpush1.msra.mxu0 0.0
        %1503 = vmatprep.subr.mxu0 0.0
        %1504 = vmatpush1.msra.mxu0 0.0
        %1505 = vmatprep.subr.mxu0 0.0
        %1506 = vmatpush1.msra.mxu0 0.0
        %1507 = vmatprep.mubr.f32.mxu0 0.0
        %1508 = vmatmul.mubr.f32.gmra.mrb[0].mxu0 %v1441
        %v1509 = vpop.f32.mrb[0].mxu0
        %v1510 = vadd.f32 0.0, %v1509
        %v1511 = vpop.f32.mrb[0].mxu0
        %1512 = vdwg.mxu0
        %v1513 = vadd.f32 %v1435, %v1510
        %v1514 = vld [vmem:[%s6] sm:$0x1]
        %v1516 = vlaneseq
        %v1517 = vshrl.u32 %v1516, 7
        %v1518 = vsub.s32 0, %v1517
        %v1519 = vrot.slane %v1514, %v1518
        %v1521 = vadd.f32 %v1513, %v1519
        %vm1522 = vcmask 261120
        %1523 = vst.msk [vmem:[%s269] sm:$0xff] %vm1522, %v1521
        %s1524 = sand.u32 %s181, 1
        %s1525 = scalar_lea.sflag [#allocation3], %s1524
        %s1526 = sand.u32 %s181, 1
        %s1527 = smul.addr %s1526, 8
        %s1528 = scalar_lea.vmem [#allocation2], %s1527
        // Predicated region
        $region49: #{encoder_forward.1} parent=47 // pred_check
          %p1529 = pneg %p191
        $region50: #{encoder_forward.1} parent=47 // pred_check_branch
          %1531 = sbr.rel (%p1529) target = $region52
        $region51: #{encoder_forward.1} parent=47 // pred_region
          %s1533 = ssub.s32 128, 128
          %1534 = vsyncadd %s1525, %s1533
          %s1535 = smul.addr %s21, 128
          %s1536 = scalar_lea.hbm %s7, %s1535
          %s1538 = sshll.u32 %s1528, 4
          %s1539 = int_to_ptr.vmem [resolvable:$true] %s1538
          %1541 = dma.vmem_to_hbm [thread:$0]  %s1539, 128, %s1536, %s1525
        $region52: #{encoder_forward.1} parent=47 // pred_fallthru
          _
      $region48: #{encoder_forward.1} parent=5 // pred_fallthru
        _
      %p1542 = scmp.le.s32.totalorder 2, %s16
      // Predicated region
      $region53: #{encoder_forward.1} parent=5 // pred_check
        %p1543 = pneg %p1542
      $region54: #{encoder_forward.1} parent=5 // pred_check_branch
        %1545 = sbr.rel (%p1543) target = $region56
      $region55: #{encoder_forward.1} parent=5 // pred_region
        %s1546 = ssub.s32 %s16, 2
        // Predicated region
        $region57: #{encoder_forward.1} parent=55 // pred_check
          %p1547 = pneg %p197
        $region58: #{encoder_forward.1} parent=55 // pred_check_branch
          %1549 = sbr.rel (%p1547) target = $region60
        $region59: #{encoder_forward.1} parent=55 // pred_region
          %s1550 = sand.u32 %s182, 1
          %s1551 = scalar_lea.sflag [#allocation3], %s1550
          %s1552 = sand.u32 %s182, 1
          %s1553 = smul.addr %s1552, 8
          %s1554 = scalar_lea.vmem [#allocation2], %s1553
          %1555 = dma.done %s1551, 128
        $region60: #{encoder_forward.1} parent=55 // pred_fallthru
          _
      $region56: #{encoder_forward.1} parent=5 // pred_fallthru
        _
    $region6: #{encoder_forward.1} parent=1 // loop_footer
      %s20 = sadd.s32 1, %s16
    $region7: #{encoder_forward.1} parent=1 // loop_footer_branch
      %15 = sbr.rel target = $region3
    $region8: #{encoder_forward.1} parent=1 // loop_exit
      _
    %1556 = vsyncpa [#allocation3], 1
    %s1557 = scalar_lea.sflag [#allocation3], 1
    %1558 = vsyncpa %s1557, 1

</llo_original>
